<compile_context>
chip_gen: v7x
topology: tpu7x:2x2x1
jax: 0.10.0
libtpu: 0.0.40
codegen_flags: <defaults>
</compile_context>

<pallas_src>
import jax
import jax.numpy as jnp
from jax.experimental import pallas as pl
from jax.experimental.pallas import tpu as pltpu

# ---------------------------------------------------------------------------
# Config (camera frames shrunk from 640x480x3 to 16x16x3 for a runnable demo;
# everything else matches ModelConfig defaults).
# ---------------------------------------------------------------------------
JOINT_POS_LEN = 10
JOINT_VEL_LEN = 10
VEC_CMD_LEN = 3
IMU_LEN = 9               # provided as (3, 3), flattened in forward
TIMESTAMP_LEN = 1
CAM_H, CAM_W, CAM_C = 16, 16, 3
CAM_LEN = CAM_H * CAM_W * CAM_C
HIDDEN = 10
NUM_LAYERS = 2
OUT_LEN = JOINT_POS_LEN

TOTAL_IN = (JOINT_POS_LEN + JOINT_VEL_LEN + VEC_CMD_LEN + IMU_LEN +
            TIMESTAMP_LEN + CAM_LEN + CAM_LEN)          # 1569
LANE = 128


def _pad_to(n, m):
    return ((n + m - 1) // m) * m


F_PAD = _pad_to(TOTAL_IN, LANE)   # 1664: MXU-aligned contraction width
H_NARROW = 16                     # hidden 10 padded only to 16 (not 128)
O_PAD = LANE                      # 128: lane-dense output row width

# Packed small-parameter buffer (bf16, shape (PACK_ROWS, 128)):
#   rows [ 0:16), cols [0:16)  : w2  (hidden x hidden)
#   rows [16:32), cols [0:128) : w3  (hidden x out)
#   row   32,     cols [0:16)  : b1
#   row   33,     cols [0:16)  : b2
#   row   34,     cols [0:128) : b3
PACK_ROWS = 48


# ---------------------------------------------------------------------------
# Kernel: full 3-layer MLP (Linear->ReLU->Linear->ReLU->Linear) on one TM tile.
# All matmuls are bf16 x bf16 on the MXU with f32 accumulation; biases added
# in f32; the f32 result is written to a lane-dense (TM, 128) output tile.
# ---------------------------------------------------------------------------
def mlp_kernel(x_ref, w1_ref, wp_ref, o_ref):
    x = x_ref[...]                                          # (TM, F_PAD) bf16
    w1 = w1_ref[...]                                        # (F_PAD, 16) bf16
    w2 = wp_ref[0:H_NARROW, 0:H_NARROW]                     # (16, 16)    bf16
    w3 = wp_ref[H_NARROW:2 * H_NARROW, :]                   # (16, 128)   bf16
    bias = wp_ref[2 * H_NARROW:PACK_ROWS, :].astype(jnp.float32)  # (16, 128)
    b1 = bias[0:1, 0:H_NARROW]                              # (1, 16)
    b2 = bias[1:2, 0:H_NARROW]                              # (1, 16)
    b3 = bias[2:3, :]                                       # (1, 128)

    h1 = jnp.dot(x, w1, preferred_element_type=jnp.float32) + b1
    h1 = jnp.maximum(h1, 0.0)                               # (TM, 16) f32

    h2 = jnp.dot(h1.astype(jnp.bfloat16), w2,
                 preferred_element_type=jnp.float32) + b2
    h2 = jnp.maximum(h2, 0.0)                               # (TM, 16) f32

    out = jnp.dot(h2.astype(jnp.bfloat16), w3,
                  preferred_element_type=jnp.float32) + b3  # (TM, 128) f32
    o_ref[...] = out.astype(o_ref.dtype)


def _tile_m(batch):
    # Largest row tile <= 128 that keeps batch padding small; multiples of 16
    # keep bf16 sublanes dense.  128 = full MXU height on v5e, half on v6e/v7x.
    return min(128, _pad_to(batch, 16))


@jax.jit
def simple_model_forward(params, joint_positions, joint_velocities,
                         vector_command, imu, timestamp,
                         camera_frame_left, camera_frame_right):
    """Mirrors SimpleModel.forward.  Accepts the module's single-sample 1-D
    inputs or the same fields with a leading batch dimension."""
    w1_pad, wp_pad = params

    single = joint_positions.ndim == 1
    if single:
        (joint_positions, joint_velocities, vector_command, imu, timestamp,
         camera_frame_left, camera_frame_right) = (
            a[None] for a in (joint_positions, joint_velocities, vector_command,
                              imu, timestamp, camera_frame_left,
                              camera_frame_right))
    b = joint_positions.shape[0]

    # Single fused concat: real features + zero pad up to F_PAD lanes.
    x = jnp.concatenate([
        joint_positions.reshape(b, -1),
        joint_velocities.reshape(b, -1),
        vector_command.reshape(b, -1),
        imu.reshape(b, -1),
        timestamp.reshape(b, -1),
        camera_frame_left.reshape(b, -1),
        camera_frame_right.reshape(b, -1),
        jnp.zeros((b, F_PAD - TOTAL_IN), jnp.float32),
    ], axis=-1).astype(jnp.bfloat16)                         # (b, F_PAD) bf16

    tm = _tile_m(b)
    b_pad = _pad_to(b, tm)
    if b_pad != b:
        x = jnp.pad(x, ((0, b_pad - b), (0, 0)))

    out = pl.pallas_call(
        mlp_kernel,
        out_shape=jax.ShapeDtypeStruct((b_pad, O_PAD), jnp.float32),
        grid=(b_pad // tm,),
        in_specs=[
            pl.BlockSpec((tm, F_PAD), lambda i: (i, 0)),         # x tile
            pl.BlockSpec((F_PAD, H_NARROW), lambda i: (0, 0)),   # w1 (reused)
            pl.BlockSpec((PACK_ROWS, LANE), lambda i: (0, 0)),   # packed params
        ],
        out_specs=pl.BlockSpec((tm, O_PAD), lambda i: (i, 0)),
        compiler_params=pltpu.CompilerParams(
            dimension_semantics=("parallel",)),  # v7x: batch tiles over 2 TCs
    )(x, w1_pad, wp_pad)

    out = out[:b, :OUT_LEN]
    return out[0] if single else out


# ---------------------------------------------------------------------------
# Deterministic parameter initialization (PyTorch-Linear-style uniform),
# quantized to bf16 (the kernel's weight dtype).  Padding regions are zero so
# they are inert through every layer.
# ---------------------------------------------------------------------------
def init_params(key):
    def linear(key, fan_in, fan_out):
        kw, kb = jax.random.split(key)
        bound = 1.0 / (fan_in ** 0.5)
        w = jax.random.uniform(kw, (fan_in, fan_out), jnp.float32, -bound, bound)
        b = jax.random.uniform(kb, (fan_out,), jnp.float32, -bound, bound)
        return w.astype(jnp.bfloat16), b.astype(jnp.bfloat16)

    k1, k2, k3 = jax.random.split(key, 3)
    w1, b1 = linear(k1, TOTAL_IN, HIDDEN)
    w2, b2 = linear(k2, HIDDEN, HIDDEN)
    w3, b3 = linear(k3, HIDDEN, OUT_LEN)

    w1_pad = (jnp.zeros((F_PAD, H_NARROW), jnp.bfloat16)
              .at[:TOTAL_IN, :HIDDEN].set(w1))
    wp = jnp.zeros((PACK_ROWS, LANE), jnp.bfloat16)
    wp = wp.at[0:HIDDEN, 0:HIDDEN].set(w2)
    wp = wp.at[H_NARROW:H_NARROW + HIDDEN, 0:OUT_LEN].set(w3)
    wp = wp.at[2 * H_NARROW + 0, 0:HIDDEN].set(b1)
    wp = wp.at[2 * H_NARROW + 1, 0:HIDDEN].set(b2)
    wp = wp.at[2 * H_NARROW + 2, 0:OUT_LEN].set(b3)

    padded = (w1_pad, wp)
    reference = (w1, b1, w2, b2, w3, b3)   # bf16-quantized, unpadded
    return padded, reference


def reference_forward(ref_params, jp, jv, vc, imu, ts, cl, cr):
    """Pure-JAX reference using the same bf16-quantized weights/activations."""
    w1, b1, w2, b2, w3, b3 = (p.astype(jnp.float32) for p in ref_params)
    b = jp.shape[0]
    x = jnp.concatenate([jp.reshape(b, -1), jv.reshape(b, -1), vc.reshape(b, -1),
                         imu.reshape(b, -1), ts.reshape(b, -1),
                         cl.reshape(b, -1), cr.reshape(b, -1)], axis=-1)
    x = x.astype(jnp.bfloat16).astype(jnp.float32)
    h = jnp.maximum(x @ w1 + b1, 0.0)
    h = h.astype(jnp.bfloat16).astype(jnp.float32)
    h = jnp.maximum(h @ w2 + b2, 0.0)
    h = h.astype(jnp.bfloat16).astype(jnp.float32)
    return h @ w3 + b3


if __name__ == "__main__":
    BATCH = 256   # control-loop samples per call (amortizes weight DMA/dispatch)

    key = jax.random.PRNGKey(0)
    kp, ki = jax.random.split(key)
    padded_params, ref_params = init_params(kp)

    ks = jax.random.split(ki, 7)
    joint_positions = jax.random.normal(ks[0], (BATCH, JOINT_POS_LEN), jnp.float32)
    joint_velocities = jax.random.normal(ks[1], (BATCH, JOINT_VEL_LEN), jnp.float32)
    vector_command = jax.random.normal(ks[2], (BATCH, VEC_CMD_LEN), jnp.float32)
    imu = jax.random.normal(ks[3], (BATCH, 3, 3), jnp.float32)
    timestamp = jax.random.normal(ks[4], (BATCH, TIMESTAMP_LEN), jnp.float32)
    camera_frame_left = jax.random.normal(ks[5], (BATCH, CAM_H, CAM_W, CAM_C),
                                          jnp.float32)
    camera_frame_right = jax.random.normal(ks[6], (BATCH, CAM_H, CAM_W, CAM_C),
                                           jnp.float32)

    # Batched path.
    joint_torques = simple_model_forward(
        padded_params, joint_positions, joint_velocities, vector_command,
        imu, timestamp, camera_frame_left, camera_frame_right)
    joint_torques = jax.block_until_ready(joint_torques)
    assert joint_torques.shape == (BATCH, OUT_LEN)

    ref = reference_forward(ref_params, joint_positions, joint_velocities,
                            vector_command, imu, timestamp,
                            camera_frame_left, camera_frame_right)
    assert jnp.allclose(joint_torques, ref, atol=5e-3, rtol=5e-3), \
        float(jnp.max(jnp.abs(joint_torques - ref)))

    # Single-sample path (original module semantics: 1-D per-field inputs).
    single = simple_model_forward(
        padded_params, joint_positions[0], joint_velocities[0],
        vector_command[0], imu[0], timestamp[0],
        camera_frame_left[0], camera_frame_right[0])
    single = jax.block_until_ready(single)
    assert single.shape == (OUT_LEN,)
    assert jnp.allclose(single, ref[0], atol=5e-3, rtol=5e-3)

    print("KERNEL_OK")
</pallas_src>

<mosaic_0001>
module attributes {stable_mosaic.version = 11 : i64} {
  func.func @mlp_kernel(%arg0: i32, %arg1: memref<128x1664xbf16, #tpu.memory_space<vmem>>, %arg2: memref<1664x16xbf16, #tpu.memory_space<vmem>>, %arg3: memref<48x128xbf16, #tpu.memory_space<vmem>>, %arg4: memref<128x128xf32, #tpu.memory_space<vmem>>) attributes {dimension_semantics = [#tpu.dimension_semantics<parallel>], iteration_bounds = array<i64: 2>, scalar_prefetch = 0 : i64, scratch_operands = 0 : i64, tpu.core_type = #tpu.core_type<tc>, window_params = [{transform_indices = @transform_0, window_bounds = array<i64: 128, 1664>}, {pipeline_mode = #tpu.pipeline_mode<synchronous>, transform_indices = @transform_1, window_bounds = array<i64: 1664, 16>}, {pipeline_mode = #tpu.pipeline_mode<synchronous>, transform_indices = @transform_2, window_bounds = array<i64: 48, 128>}, {transform_indices = @transform_3, window_bounds = array<i64: 128, 128>}]} {
    %c0 = arith.constant 0 : index
    %c0_0 = arith.constant 0 : index
    %0 = vector.load %arg1[%c0, %c0_0] : memref<128x1664xbf16, #tpu.memory_space<vmem>>, vector<128x1664xbf16>
    %c0_1 = arith.constant 0 : index
    %c0_2 = arith.constant 0 : index
    %1 = vector.load %arg2[%c0_1, %c0_2] : memref<1664x16xbf16, #tpu.memory_space<vmem>>, vector<1664x16xbf16>
    %c0_3 = arith.constant 0 : index
    %c0_4 = arith.constant 0 : index
    %2 = vector.load %arg3[%c0_3, %c0_4] : memref<48x128xbf16, #tpu.memory_space<vmem>>, vector<16x16xbf16>
    %c16 = arith.constant 16 : index
    %c0_5 = arith.constant 0 : index
    %3 = vector.load %arg3[%c16, %c0_5] : memref<48x128xbf16, #tpu.memory_space<vmem>>, vector<16x128xbf16>
    %c32 = arith.constant 32 : index
    %c0_6 = arith.constant 0 : index
    %4 = vector.load %arg3[%c32, %c0_6] : memref<48x128xbf16, #tpu.memory_space<vmem>>, vector<16x128xbf16>
    %5 = arith.extf %4 : vector<16x128xbf16> to vector<16x128xf32>
    %6 = vector.extract_strided_slice %5 {offsets = [0, 0], sizes = [1, 16], strides = [1, 1]} : vector<16x128xf32> to vector<1x16xf32>
    %7 = vector.extract_strided_slice %5 {offsets = [1, 0], sizes = [1, 16], strides = [1, 1]} : vector<16x128xf32> to vector<1x16xf32>
    %8 = vector.extract_strided_slice %5 {offsets = [2, 0], sizes = [1, 128], strides = [1, 1]} : vector<16x128xf32> to vector<1x128xf32>
    %cst = arith.constant dense<0.000000e+00> : vector<128x16xf32>
    %9 = tpu.matmul %0, %1, %cst {dimension_numbers = #tpu.dot_dimension_numbers<[1], [0], [0], [1], [0, 0, 1, 1], [], []>} : vector<128x1664xbf16>, vector<1664x16xbf16>, vector<128x16xf32> -> vector<128x16xf32>
    %10 = vector.broadcast %6 : vector<1x16xf32> to vector<128x16xf32>
    %11 = arith.addf %9, %10 : vector<128x16xf32>
    %cst_7 = arith.constant 0.000000e+00 : f32
    %12 = vector.broadcast %cst_7 : f32 to vector<128x16xf32>
    %13 = arith.maximumf %11, %12 : vector<128x16xf32>
    %14 = arith.truncf %13 : vector<128x16xf32> to vector<128x16xbf16>
    %cst_8 = arith.constant dense<0.000000e+00> : vector<128x16xf32>
    %15 = tpu.matmul %14, %2, %cst_8 {dimension_numbers = #tpu.dot_dimension_numbers<[1], [0], [0], [1], [0, 0, 1, 1], [], []>} : vector<128x16xbf16>, vector<16x16xbf16>, vector<128x16xf32> -> vector<128x16xf32>
    %16 = vector.broadcast %7 : vector<1x16xf32> to vector<128x16xf32>
    %17 = arith.addf %15, %16 : vector<128x16xf32>
    %cst_9 = arith.constant 0.000000e+00 : f32
    %18 = vector.broadcast %cst_9 : f32 to vector<128x16xf32>
    %19 = arith.maximumf %17, %18 : vector<128x16xf32>
    %20 = arith.truncf %19 : vector<128x16xf32> to vector<128x16xbf16>
    %cst_10 = arith.constant dense<0.000000e+00> : vector<128x128xf32>
    %21 = tpu.matmul %20, %3, %cst_10 {dimension_numbers = #tpu.dot_dimension_numbers<[1], [0], [0], [1], [0, 0, 1, 1], [], []>} : vector<128x16xbf16>, vector<16x128xbf16>, vector<128x128xf32> -> vector<128x128xf32>
    %22 = vector.broadcast %8 : vector<1x128xf32> to vector<128x128xf32>
    %23 = arith.addf %21, %22 : vector<128x128xf32>
    %c0_11 = arith.constant 0 : index
    %c0_12 = arith.constant 0 : index
    %24 = vector.load %arg4[%c0_11, %c0_12] : memref<128x128xf32, #tpu.memory_space<vmem>>, vector<128x128xf32>
    tpu.vector_store %arg4[%c0_11, %c0_12], %23 {strides = array<i32>} : memref<128x128xf32, #tpu.memory_space<vmem>>, vector<128x128xf32>,
    return
  }
  func.func @transform_0(%arg0: i32) -> (i32, i32) {
    %c0_i32 = arith.constant 0 : i32
    %c0_i32_0 = arith.constant 0 : i32
    return %arg0, %c0_i32 : i32, i32
  }
  func.func @transform_1(%arg0: i32) -> (i32, i32) {
    %c0_i32 = arith.constant 0 : i32
    %c0_i32_0 = arith.constant 0 : i32
    %c0_i32_1 = arith.constant 0 : i32
    return %c0_i32, %c0_i32_0 : i32, i32
  }
  func.func @transform_2(%arg0: i32) -> (i32, i32) {
    %c0_i32 = arith.constant 0 : i32
    %c0_i32_0 = arith.constant 0 : i32
    %c0_i32_1 = arith.constant 0 : i32
    return %c0_i32, %c0_i32_0 : i32, i32
  }
  func.func @transform_3(%arg0: i32) -> (i32, i32) {
    %c0_i32 = arith.constant 0 : i32
    %c0_i32_0 = arith.constant 0 : i32
    return %arg0, %c0_i32 : i32, i32
  }
}

</mosaic_0001>

<llo_original>
// kernel: simple_model_forward.1
$region0: #{simple_model_forward.1}
  #allocation0 [shape = 'u32[]', space=smem, size = 0x4, offset = 0x4, fixed_abs, tag = 'smem constant byte address 0x4 - core index']
  #allocation1 [shape = 'u32[144,128]{1,0:T(1,128)}', space=vmem, size = 0x12000, scoped, tag = 'internal scratch']
  %s0 = inlined_call_operand.vmem [shape: bf16[256,1664], index: 0, kind: input, shape index: {}]
  %s1 = inlined_call_operand.vmem [shape: bf16[1664,16], index: 1, kind: input, shape index: {}]
  %s2 = inlined_call_operand.vmem [shape: bf16[48,128], index: 2, kind: input, shape index: {}]
  %s3 = inlined_call_operand.vmem [shape: f32[256,128], index: 3, kind: output, shape index: {}]
  %s4 = sld [smem:[#allocation0]]
  $region45: #{simple_model_forward.1} parent=0
    _
  %s6 = ssub.s32 1, %s4
  %s7 = scalar_select 0, %s6, %s4
  loop: start=0, step=1, limit=4
  $region2: #{simple_model_forward.1} parent=0 // loop_pre_header
    _
  $region3: #{simple_model_forward.1} parent=0 // loop_header
    %s9 = sphi 0, %s13
    %p10 = scmp.ge.s32.totalorder %s9, 4
    %s19 = sphi 0, %s21
    %s22 = sphi 0, %s19
    %s23 = sphi 0, %s22
    %s39 = sphi 0, %s23
    %s43 = sphi 0, %s43
    %s45 = sphi 0, %s43
    %s46 = sphi 0, %s45
    %s60 = sphi 0, %s46
    %s64 = sphi 0, %s64
    %s66 = sphi 0, %s64
    %s67 = sphi 0, %s66
    %s81 = sphi 0, %s67
    %s87 = sphi 0, %s89
    %s90 = sphi 0, %s87
    %s91 = sphi 0, %s90
    %s107 = sphi 0, %s91
  $region4: #{simple_model_forward.1} parent=0 // loop_header_branch
    %12 = sbr.rel (%p10) target = $region8
  $region5: #{simple_model_forward.1} parent=0 // loop_body
    %s14 = ssub.s32 %s9, 1
    %s15 = ssub.s32 %s9, 2
    %s16 = sadd.s32 %s9, 1
    %s17 = ssub.s32 %s9, %s16
    %p18 = scmp.eq.s32.totalorder %s17, 0
    %s20 = sadd.s32 %s19, 1
    %s21 = scalar_select %p18, %s19, %s20
    %p24 = pneg %p18
    %p25 = scmp.eq.s32.totalorder %s9, 1
    %p26 = por %p24, %p25
    %p27 = scmp.ne.s32.totalorder %s19, %s22
    %p28 = scmp.eq.s32.totalorder %s9, 0
    %p29 = por %p27, %p28
    %p30 = scmp.ne.s32.totalorder %s19, %s22
    %p31 = scmp.eq.s32.totalorder %s14, 1
    %p32 = por %p30, %p31
    %p33 = scmp.ne.s32.totalorder %s22, %s23
    %p34 = scmp.eq.s32.totalorder %s14, 0
    %p35 = por %p33, %p34
    %p36 = scmp.ne.s32.totalorder %s22, %s23
    %p37 = scmp.eq.s32.totalorder %s15, 1
    %p38 = por %p36, %p37
    %p40 = scmp.ne.s32.totalorder %s23, %s39
    %p41 = scmp.eq.s32.totalorder %s15, 0
    %p42 = por %p40, %p41
    %s44 = sadd.s32 %s43, 1
    %p47 = scmp.eq.s32.totalorder %s9, 1
    %p48 = scmp.ne.s32.totalorder %s43, %s45
    %p49 = scmp.eq.s32.totalorder %s9, 0
    %p50 = por %p48, %p49
    %p51 = scmp.ne.s32.totalorder %s43, %s45
    %p52 = scmp.eq.s32.totalorder %s14, 1
    %p53 = por %p51, %p52
    %p54 = scmp.ne.s32.totalorder %s45, %s46
    %p55 = scmp.eq.s32.totalorder %s14, 0
    %p56 = por %p54, %p55
    %p57 = scmp.ne.s32.totalorder %s45, %s46
    %p58 = scmp.eq.s32.totalorder %s15, 1
    %p59 = por %p57, %p58
    %p61 = scmp.ne.s32.totalorder %s46, %s60
    %p62 = scmp.eq.s32.totalorder %s15, 0
    %p63 = por %p61, %p62
    %s65 = sadd.s32 %s64, 1
    %p68 = scmp.eq.s32.totalorder %s9, 1
    %p69 = scmp.ne.s32.totalorder %s64, %s66
    %p70 = scmp.eq.s32.totalorder %s9, 0
    %p71 = por %p69, %p70
    %p72 = scmp.ne.s32.totalorder %s64, %s66
    %p73 = scmp.eq.s32.totalorder %s14, 1
    %p74 = por %p72, %p73
    %p75 = scmp.ne.s32.totalorder %s66, %s67
    %p76 = scmp.eq.s32.totalorder %s14, 0
    %p77 = por %p75, %p76
    %p78 = scmp.ne.s32.totalorder %s66, %s67
    %p79 = scmp.eq.s32.totalorder %s15, 1
    %p80 = por %p78, %p79
    %p82 = scmp.ne.s32.totalorder %s67, %s81
    %p83 = scmp.eq.s32.totalorder %s15, 0
    %p84 = por %p82, %p83
    %s85 = ssub.s32 %s9, %s16
    %p86 = scmp.eq.s32.totalorder %s85, 0
    %s88 = sadd.s32 %s87, 1
    %s89 = scalar_select %p86, %s87, %s88
    %p92 = pneg %p86
    %p93 = scmp.eq.s32.totalorder %s9, 1
    %p94 = por %p92, %p93
    %p95 = scmp.ne.s32.totalorder %s87, %s90
    %p96 = scmp.eq.s32.totalorder %s9, 0
    %p97 = por %p95, %p96
    %p98 = scmp.ne.s32.totalorder %s87, %s90
    %p99 = scmp.eq.s32.totalorder %s14, 1
    %p100 = por %p98, %p99
    %p101 = scmp.ne.s32.totalorder %s90, %s91
    %p102 = scmp.eq.s32.totalorder %s14, 0
    %p103 = por %p101, %p102
    %p104 = scmp.ne.s32.totalorder %s90, %s91
    %p105 = scmp.eq.s32.totalorder %s15, 1
    %p106 = por %p104, %p105
    %p108 = scmp.ne.s32.totalorder %s91, %s107
    %p109 = scmp.eq.s32.totalorder %s15, 0
    %p110 = por %p108, %p109
    %p111 = scmp.le.s32.totalorder 1, %s9
    %p112 = scmp.lt.s32.totalorder %s9, 3
    %p113 = pnand %p111, %p112
    %p114 = pneg %p113
    // Predicated region
    $region9: #{simple_model_forward.1} parent=5 // pred_check
      _
    $region10: #{simple_model_forward.1} parent=5 // pred_check_branch
      %116 = sbr.rel (%p113) target = $region12
    $region11: #{simple_model_forward.1} parent=5 // pred_region
      %s117 = ssub.s32 %s9, 1
      // Predicated region
      $region13: #{simple_model_forward.1} parent=11 // pred_check
        %p118 = pneg %p56
      $region14: #{simple_model_forward.1} parent=11 // pred_check_branch
        %120 = sbr.rel (%p118) target = $region16
      $region15: #{simple_model_forward.1} parent=11 // pred_region
        _
      $region16: #{simple_model_forward.1} parent=11 // pred_fallthru
        _
      // Predicated region
      $region17: #{simple_model_forward.1} parent=11 // pred_check
        %p121 = pneg %p77
      $region18: #{simple_model_forward.1} parent=11 // pred_check_branch
        %123 = sbr.rel (%p121) target = $region20
      $region19: #{simple_model_forward.1} parent=11 // pred_region
        _
      $region20: #{simple_model_forward.1} parent=11 // pred_fallthru
        _
    $region12: #{simple_model_forward.1} parent=5 // pred_fallthru
      _
    %p124 = scmp.lt.s32.totalorder %s9, 2
    // Predicated region
    $region21: #{simple_model_forward.1} parent=5 // pred_check
      %p125 = pneg %p124
    $region22: #{simple_model_forward.1} parent=5 // pred_check_branch
      %127 = sbr.rel (%p125) target = $region24
    $region23: #{simple_model_forward.1} parent=5 // pred_region
      // Predicated region
      $region25: #{simple_model_forward.1} parent=23 // pred_check
        %p128 = pneg %p29
      $region26: #{simple_model_forward.1} parent=23 // pred_check_branch
        %130 = sbr.rel (%p128) target = $region28
      $region27: #{simple_model_forward.1} parent=23 // pred_region
        %s131 = smul.u32 16, %s9
        %p132 = scmp.lt.s32.totalorder %s131, 31
        %s133 = scalar_select %p132, %s131, 31
        %s134 = smul.addr %s133, 13
        %s135 = smul.addr %s134, 4
        %s136 = scalar_lea.vmem %s0, %s135
        %s137 = smul.u32 16, %s9
      $region28: #{simple_model_forward.1} parent=23 // pred_fallthru
        _
    $region24: #{simple_model_forward.1} parent=5 // pred_fallthru
      _
    %p138 = scmp.le.s32.totalorder 1, %s9
    %p139 = scmp.lt.s32.totalorder %s9, 3
    %p140 = pnand %p138, %p139
    %p141 = pneg %p140
    // Predicated region
    $region29: #{simple_model_forward.1} parent=5 // pred_check
      _
    $region30: #{simple_model_forward.1} parent=5 // pred_check_branch
      %143 = sbr.rel (%p140) target = $region32
    $region31: #{simple_model_forward.1} parent=5 // pred_region
      %s144 = ssub.s32 %s9, 1
      %s145 = smul.u32 16, %s14
      %p146 = scmp.lt.s32.totalorder %s145, 31
      %s147 = scalar_select %p146, %s145, 31
      %s148 = smul.addr %s147, 13
      %s149 = smul.addr %s148, 4
      %s150 = scalar_lea.vmem %s0, %s149
      %p151 = pneg %p35
      %p152 = pneg %p32
      %p153 = pneg %p56
      %p154 = pneg %p53
      %p155 = pneg %p77
      %p156 = pneg %p74
      %p157 = pneg %p103
      %p158 = pneg %p100
      %s159 = smul.u32 16, %s14
      %p160 = scmp.lt.s32.totalorder %s159, 31
      %s161 = scalar_select %p160, %s159, 31
      %s162 = smul.addr %s161, 8
      %s163 = scalar_lea.vmem %s3, %s162
      %s164 = smul.u32 16, %s14
      %p165 = scmp.lt.s32.totalorder %s164, 31
      %s166 = scalar_select %p165, %s164, 31
      %s167 = smul.addr %s166, 13
      %s168 = smul.addr %s167, 4
      %s169 = scalar_lea.vmem %s0, %s168
      %s170 = smul.u32 16, %s14
      %s171 = smul.u32 16, %s14
      %p172 = scmp.lt.s32.totalorder %s171, 31
      %s173 = scalar_select %p172, %s171, 31
      %s174 = smul.addr %s173, 8
      %s175 = scalar_lea.vmem %s3, %s174
      %s176 = smul.u32 16, %s14
      %v178 = vld [vmem:[%s169] sm:$0xff]
      %v179 = vld [vmem:[%s169 + $0x8] sm:$0xff]
      %v180 = vld [vmem:[%s169 + $0x10] sm:$0xff]
      %v181 = vld [vmem:[%s169 + $0x18] sm:$0xff]
      %v182 = vld [vmem:[%s169 + $0x20] sm:$0xff]
      %v183 = vld [vmem:[%s169 + $0x28] sm:$0xff]
      %v184 = vld [vmem:[%s169 + $0x30] sm:$0xf]
      %v185 = vld [vmem:[%s169 + $0x34] sm:$0xff]
      %v186 = vld [vmem:[%s169 + $0x3c] sm:$0xff]
      %v187 = vld [vmem:[%s169 + $0x44] sm:$0xff]
      %v188 = vld [vmem:[%s169 + $0x4c] sm:$0xff]
      %v189 = vld [vmem:[%s169 + $0x54] sm:$0xff]
      %v190 = vld [vmem:[%s169 + $0x5c] sm:$0xff]
      %v191 = vld [vmem:[%s169 + $0x64] sm:$0xf]
      %v192 = vld [vmem:[%s169 + $0x68] sm:$0xff]
      %v193 = vld [vmem:[%s169 + $0x70] sm:$0xff]
      %v194 = vld [vmem:[%s169 + $0x78] sm:$0xff]
      %v195 = vld [vmem:[%s169 + $0x80] sm:$0xff]
      %v196 = vld [vmem:[%s169 + $0x88] sm:$0xff]
      %v197 = vld [vmem:[%s169 + $0x90] sm:$0xff]
      %v198 = vld [vmem:[%s169 + $0x98] sm:$0xf]
      %v199 = vld [vmem:[%s169 + $0x9c] sm:$0xff]
      %v200 = vld [vmem:[%s169 + $0xa4] sm:$0xff]
      %v201 = vld [vmem:[%s169 + $0xac] sm:$0xff]
      %v202 = vld [vmem:[%s169 + $0xb4] sm:$0xff]
      %v203 = vld [vmem:[%s169 + $0xbc] sm:$0xff]
      %v204 = vld [vmem:[%s169 + $0xc4] sm:$0xff]
      %v205 = vld [vmem:[%s169 + $0xcc] sm:$0xf]
      %v206 = vld [vmem:[%s169 + $0xd0] sm:$0xff]
      %v207 = vld [vmem:[%s169 + $0xd8] sm:$0xff]
      %v208 = vld [vmem:[%s169 + $0xe0] sm:$0xff]
      %v209 = vld [vmem:[%s169 + $0xe8] sm:$0xff]
      %v210 = vld [vmem:[%s169 + $0xf0] sm:$0xff]
      %v211 = vld [vmem:[%s169 + $0xf8] sm:$0xff]
      %v212 = vld [vmem:[%s169 + $0x100] sm:$0xf]
      %v213 = vld [vmem:[%s169 + $0x104] sm:$0xff]
      %v214 = vld [vmem:[%s169 + $0x10c] sm:$0xff]
      %v215 = vld [vmem:[%s169 + $0x114] sm:$0xff]
      %v216 = vld [vmem:[%s169 + $0x11c] sm:$0xff]
      %v217 = vld [vmem:[%s169 + $0x124] sm:$0xff]
      %v218 = vld [vmem:[%s169 + $0x12c] sm:$0xff]
      %v219 = vld [vmem:[%s169 + $0x134] sm:$0xf]
      %v220 = vld [vmem:[%s169 + $0x138] sm:$0xff]
      %v221 = vld [vmem:[%s169 + $0x140] sm:$0xff]
      %v222 = vld [vmem:[%s169 + $0x148] sm:$0xff]
      %v223 = vld [vmem:[%s169 + $0x150] sm:$0xff]
      %v224 = vld [vmem:[%s169 + $0x158] sm:$0xff]
      %v225 = vld [vmem:[%s169 + $0x160] sm:$0xff]
      %v226 = vld [vmem:[%s169 + $0x168] sm:$0xf]
      %v227 = vld [vmem:[%s169 + $0x16c] sm:$0xff]
      %v228 = vld [vmem:[%s169 + $0x174] sm:$0xff]
      %v229 = vld [vmem:[%s169 + $0x17c] sm:$0xff]
      %v230 = vld [vmem:[%s169 + $0x184] sm:$0xff]
      %v231 = vld [vmem:[%s169 + $0x18c] sm:$0xff]
      %v232 = vld [vmem:[%s169 + $0x194] sm:$0xff]
      %v233 = vld [vmem:[%s169 + $0x19c] sm:$0xf]
      %v234 = vld [vmem:[%s169 + $0x1a0] sm:$0xff]
      %v235 = vld [vmem:[%s169 + $0x1a8] sm:$0xff]
      %v236 = vld [vmem:[%s169 + $0x1b0] sm:$0xff]
      %v237 = vld [vmem:[%s169 + $0x1b8] sm:$0xff]
      %v238 = vld [vmem:[%s169 + $0x1c0] sm:$0xff]
      %v239 = vld [vmem:[%s169 + $0x1c8] sm:$0xff]
      %v240 = vld [vmem:[%s169 + $0x1d0] sm:$0xf]
      %v241 = vld [vmem:[%s169 + $0x1d4] sm:$0xff]
      %v242 = vld [vmem:[%s169 + $0x1dc] sm:$0xff]
      %v243 = vld [vmem:[%s169 + $0x1e4] sm:$0xff]
      %v244 = vld [vmem:[%s169 + $0x1ec] sm:$0xff]
      %v245 = vld [vmem:[%s169 + $0x1f4] sm:$0xff]
      %v246 = vld [vmem:[%s169 + $0x1fc] sm:$0xff]
      %v247 = vld [vmem:[%s169 + $0x204] sm:$0xf]
      %v248 = vld [vmem:[%s169 + $0x208] sm:$0xff]
      %v249 = vld [vmem:[%s169 + $0x210] sm:$0xff]
      %v250 = vld [vmem:[%s169 + $0x218] sm:$0xff]
      %v251 = vld [vmem:[%s169 + $0x220] sm:$0xff]
      %v252 = vld [vmem:[%s169 + $0x228] sm:$0xff]
      %v253 = vld [vmem:[%s169 + $0x230] sm:$0xff]
      %v254 = vld [vmem:[%s169 + $0x238] sm:$0xf]
      %v255 = vld [vmem:[%s169 + $0x23c] sm:$0xff]
      %v256 = vld [vmem:[%s169 + $0x244] sm:$0xff]
      %v257 = vld [vmem:[%s169 + $0x24c] sm:$0xff]
      %v258 = vld [vmem:[%s169 + $0x254] sm:$0xff]
      %v259 = vld [vmem:[%s169 + $0x25c] sm:$0xff]
      %v260 = vld [vmem:[%s169 + $0x264] sm:$0xff]
      %v261 = vld [vmem:[%s169 + $0x26c] sm:$0xf]
      %v262 = vld [vmem:[%s169 + $0x270] sm:$0xff]
      %v263 = vld [vmem:[%s169 + $0x278] sm:$0xff]
      %v264 = vld [vmem:[%s169 + $0x280] sm:$0xff]
      %v265 = vld [vmem:[%s169 + $0x288] sm:$0xff]
      %v266 = vld [vmem:[%s169 + $0x290] sm:$0xff]
      %v267 = vld [vmem:[%s169 + $0x298] sm:$0xff]
      %v268 = vld [vmem:[%s169 + $0x2a0] sm:$0xf]
      %v269 = vld [vmem:[%s169 + $0x2a4] sm:$0xff]
      %v270 = vld [vmem:[%s169 + $0x2ac] sm:$0xff]
      %v271 = vld [vmem:[%s169 + $0x2b4] sm:$0xff]
      %v272 = vld [vmem:[%s169 + $0x2bc] sm:$0xff]
      %v273 = vld [vmem:[%s169 + $0x2c4] sm:$0xff]
      %v274 = vld [vmem:[%s169 + $0x2cc] sm:$0xff]
      %v275 = vld [vmem:[%s169 + $0x2d4] sm:$0xf]
      %v276 = vld [vmem:[%s169 + $0x2d8] sm:$0xff]
      %v277 = vld [vmem:[%s169 + $0x2e0] sm:$0xff]
      %v278 = vld [vmem:[%s169 + $0x2e8] sm:$0xff]
      %v279 = vld [vmem:[%s169 + $0x2f0] sm:$0xff]
      %v280 = vld [vmem:[%s169 + $0x2f8] sm:$0xff]
      %v281 = vld [vmem:[%s169 + $0x300] sm:$0xff]
      %v282 = vld [vmem:[%s169 + $0x308] sm:$0xf]
      %v283 = vld [vmem:[%s169 + $0x30c] sm:$0xff]
      %v284 = vld [vmem:[%s169 + $0x314] sm:$0xff]
      %v285 = vld [vmem:[%s169 + $0x31c] sm:$0xff]
      %v286 = vld [vmem:[%s169 + $0x324] sm:$0xff]
      %v287 = vld [vmem:[%s169 + $0x32c] sm:$0xff]
      %v288 = vld [vmem:[%s169 + $0x334] sm:$0xff]
      %v289 = vld [vmem:[%s169 + $0x33c] sm:$0xf]
      %v290 = vld [vmem:[%s1] sm:$0xf]
      %v291 = vld [vmem:[%s1 + $0x4] sm:$0xf]
      %v292 = vld [vmem:[%s1 + $0x8] sm:$0xf]
      %v293 = vld [vmem:[%s1 + $0xc] sm:$0xf]
      %v294 = vld [vmem:[%s1 + $0x10] sm:$0xf]
      %v295 = vld [vmem:[%s1 + $0x14] sm:$0xf]
      %v296 = vld [vmem:[%s1 + $0x18] sm:$0xf]
      %v297 = vld [vmem:[%s1 + $0x1c] sm:$0xf]
      %v298 = vld [vmem:[%s1 + $0x20] sm:$0xf]
      %v299 = vld [vmem:[%s1 + $0x24] sm:$0xf]
      %v300 = vld [vmem:[%s1 + $0x28] sm:$0xf]
      %v301 = vld [vmem:[%s1 + $0x2c] sm:$0xf]
      %v302 = vld [vmem:[%s1 + $0x30] sm:$0xf]
      %v303 = vld [vmem:[%s1 + $0x34] sm:$0xf]
      %v304 = vld [vmem:[%s1 + $0x38] sm:$0xf]
      %v305 = vld [vmem:[%s1 + $0x3c] sm:$0xf]
      %v306 = vld [vmem:[%s1 + $0x40] sm:$0xf]
      %v307 = vld [vmem:[%s1 + $0x44] sm:$0xf]
      %v308 = vld [vmem:[%s1 + $0x48] sm:$0xf]
      %v309 = vld [vmem:[%s1 + $0x4c] sm:$0xf]
      %v310 = vld [vmem:[%s1 + $0x50] sm:$0xf]
      %v311 = vld [vmem:[%s1 + $0x54] sm:$0xf]
      %v312 = vld [vmem:[%s1 + $0x58] sm:$0xf]
      %v313 = vld [vmem:[%s1 + $0x5c] sm:$0xf]
      %v314 = vld [vmem:[%s1 + $0x60] sm:$0xf]
      %v315 = vld [vmem:[%s1 + $0x64] sm:$0xf]
      %v316 = vld [vmem:[%s1 + $0x68] sm:$0xf]
      %v317 = vld [vmem:[%s1 + $0x6c] sm:$0xf]
      %v318 = vld [vmem:[%s1 + $0x70] sm:$0xf]
      %v319 = vld [vmem:[%s1 + $0x74] sm:$0xf]
      %v320 = vld [vmem:[%s1 + $0x78] sm:$0xf]
      %v321 = vld [vmem:[%s1 + $0x7c] sm:$0xf]
      %v322 = vld [vmem:[%s1 + $0x80] sm:$0xf]
      %v323 = vld [vmem:[%s1 + $0x84] sm:$0xf]
      %v324 = vld [vmem:[%s1 + $0x88] sm:$0xf]
      %v325 = vld [vmem:[%s1 + $0x8c] sm:$0xf]
      %v326 = vld [vmem:[%s1 + $0x90] sm:$0xf]
      %v327 = vld [vmem:[%s1 + $0x94] sm:$0xf]
      %v328 = vld [vmem:[%s1 + $0x98] sm:$0xf]
      %v329 = vld [vmem:[%s1 + $0x9c] sm:$0xf]
      %v330 = vld [vmem:[%s1 + $0xa0] sm:$0xf]
      %v331 = vld [vmem:[%s1 + $0xa4] sm:$0xf]
      %v332 = vld [vmem:[%s1 + $0xa8] sm:$0xf]
      %v333 = vld [vmem:[%s1 + $0xac] sm:$0xf]
      %v334 = vld [vmem:[%s1 + $0xb0] sm:$0xf]
      %v335 = vld [vmem:[%s1 + $0xb4] sm:$0xf]
      %v336 = vld [vmem:[%s1 + $0xb8] sm:$0xf]
      %v337 = vld [vmem:[%s1 + $0xbc] sm:$0xf]
      %v338 = vld [vmem:[%s1 + $0xc0] sm:$0xf]
      %v339 = vld [vmem:[%s1 + $0xc4] sm:$0xf]
      %v340 = vld [vmem:[%s1 + $0xc8] sm:$0xf]
      %v341 = vld [vmem:[%s1 + $0xcc] sm:$0xf]
      %v342 = vld [vmem:[%s1 + $0xd0] sm:$0xf]
      %v343 = vld [vmem:[%s1 + $0xd4] sm:$0xf]
      %v344 = vld [vmem:[%s1 + $0xd8] sm:$0xf]
      %v345 = vld [vmem:[%s1 + $0xdc] sm:$0xf]
      %v346 = vld [vmem:[%s1 + $0xe0] sm:$0xf]
      %v347 = vld [vmem:[%s1 + $0xe4] sm:$0xf]
      %v348 = vld [vmem:[%s1 + $0xe8] sm:$0xf]
      %v349 = vld [vmem:[%s1 + $0xec] sm:$0xf]
      %v350 = vld [vmem:[%s1 + $0xf0] sm:$0xf]
      %v351 = vld [vmem:[%s1 + $0xf4] sm:$0xf]
      %v352 = vld [vmem:[%s1 + $0xf8] sm:$0xf]
      %v353 = vld [vmem:[%s1 + $0xfc] sm:$0xf]
      %v354 = vld [vmem:[%s1 + $0x100] sm:$0xf]
      %v355 = vld [vmem:[%s1 + $0x104] sm:$0xf]
      %v356 = vld [vmem:[%s1 + $0x108] sm:$0xf]
      %v357 = vld [vmem:[%s1 + $0x10c] sm:$0xf]
      %v358 = vld [vmem:[%s1 + $0x110] sm:$0xf]
      %v359 = vld [vmem:[%s1 + $0x114] sm:$0xf]
      %v360 = vld [vmem:[%s1 + $0x118] sm:$0xf]
      %v361 = vld [vmem:[%s1 + $0x11c] sm:$0xf]
      %v362 = vld [vmem:[%s1 + $0x120] sm:$0xf]
      %v363 = vld [vmem:[%s1 + $0x124] sm:$0xf]
      %v364 = vld [vmem:[%s1 + $0x128] sm:$0xf]
      %v365 = vld [vmem:[%s1 + $0x12c] sm:$0xf]
      %v366 = vld [vmem:[%s1 + $0x130] sm:$0xf]
      %v367 = vld [vmem:[%s1 + $0x134] sm:$0xf]
      %v368 = vld [vmem:[%s1 + $0x138] sm:$0xf]
      %v369 = vld [vmem:[%s1 + $0x13c] sm:$0xf]
      %v370 = vld [vmem:[%s1 + $0x140] sm:$0xf]
      %v371 = vld [vmem:[%s1 + $0x144] sm:$0xf]
      %v372 = vld [vmem:[%s1 + $0x148] sm:$0xf]
      %v373 = vld [vmem:[%s1 + $0x14c] sm:$0xf]
      %v374 = vld [vmem:[%s1 + $0x150] sm:$0xf]
      %v375 = vld [vmem:[%s1 + $0x154] sm:$0xf]
      %v376 = vld [vmem:[%s1 + $0x158] sm:$0xf]
      %v377 = vld [vmem:[%s1 + $0x15c] sm:$0xf]
      %v378 = vld [vmem:[%s1 + $0x160] sm:$0xf]
      %v379 = vld [vmem:[%s1 + $0x164] sm:$0xf]
      %v380 = vld [vmem:[%s1 + $0x168] sm:$0xf]
      %v381 = vld [vmem:[%s1 + $0x16c] sm:$0xf]
      %v382 = vld [vmem:[%s1 + $0x170] sm:$0xf]
      %v383 = vld [vmem:[%s1 + $0x174] sm:$0xf]
      %v384 = vld [vmem:[%s1 + $0x178] sm:$0xf]
      %v385 = vld [vmem:[%s1 + $0x17c] sm:$0xf]
      %v386 = vld [vmem:[%s1 + $0x180] sm:$0xf]
      %v387 = vld [vmem:[%s1 + $0x184] sm:$0xf]
      %v388 = vld [vmem:[%s1 + $0x188] sm:$0xf]
      %v389 = vld [vmem:[%s1 + $0x18c] sm:$0xf]
      %v390 = vld [vmem:[%s1 + $0x190] sm:$0xf]
      %v391 = vld [vmem:[%s1 + $0x194] sm:$0xf]
      %v392 = vld [vmem:[%s1 + $0x198] sm:$0xf]
      %v393 = vld [vmem:[%s1 + $0x19c] sm:$0xf]
      %v394 = vld [vmem:[%s1 + $0x1a0] sm:$0xf]
      %v395 = vld [vmem:[%s1 + $0x1a4] sm:$0xf]
      %v396 = vld [vmem:[%s1 + $0x1a8] sm:$0xf]
      %v397 = vld [vmem:[%s1 + $0x1ac] sm:$0xf]
      %v398 = vld [vmem:[%s1 + $0x1b0] sm:$0xf]
      %v399 = vld [vmem:[%s1 + $0x1b4] sm:$0xf]
      %v400 = vld [vmem:[%s1 + $0x1b8] sm:$0xf]
      %v401 = vld [vmem:[%s1 + $0x1bc] sm:$0xf]
      %v402 = vld [vmem:[%s1 + $0x1c0] sm:$0xf]
      %v403 = vld [vmem:[%s1 + $0x1c4] sm:$0xf]
      %v404 = vld [vmem:[%s1 + $0x1c8] sm:$0xf]
      %v405 = vld [vmem:[%s1 + $0x1cc] sm:$0xf]
      %v406 = vld [vmem:[%s1 + $0x1d0] sm:$0xf]
      %v407 = vld [vmem:[%s1 + $0x1d4] sm:$0xf]
      %v408 = vld [vmem:[%s1 + $0x1d8] sm:$0xf]
      %v409 = vld [vmem:[%s1 + $0x1dc] sm:$0xf]
      %v410 = vld [vmem:[%s1 + $0x1e0] sm:$0xf]
      %v411 = vld [vmem:[%s1 + $0x1e4] sm:$0xf]
      %v412 = vld [vmem:[%s1 + $0x1e8] sm:$0xf]
      %v413 = vld [vmem:[%s1 + $0x1ec] sm:$0xf]
      %v414 = vld [vmem:[%s1 + $0x1f0] sm:$0xf]
      %v415 = vld [vmem:[%s1 + $0x1f4] sm:$0xf]
      %v416 = vld [vmem:[%s1 + $0x1f8] sm:$0xf]
      %v417 = vld [vmem:[%s1 + $0x1fc] sm:$0xf]
      %v418 = vld [vmem:[%s1 + $0x200] sm:$0xf]
      %v419 = vld [vmem:[%s1 + $0x204] sm:$0xf]
      %v420 = vld [vmem:[%s1 + $0x208] sm:$0xf]
      %v421 = vld [vmem:[%s1 + $0x20c] sm:$0xf]
      %v422 = vld [vmem:[%s1 + $0x210] sm:$0xf]
      %v423 = vld [vmem:[%s1 + $0x214] sm:$0xf]
      %v424 = vld [vmem:[%s1 + $0x218] sm:$0xf]
      %v425 = vld [vmem:[%s1 + $0x21c] sm:$0xf]
      %v426 = vld [vmem:[%s1 + $0x220] sm:$0xf]
      %v427 = vld [vmem:[%s1 + $0x224] sm:$0xf]
      %v428 = vld [vmem:[%s1 + $0x228] sm:$0xf]
      %v429 = vld [vmem:[%s1 + $0x22c] sm:$0xf]
      %v430 = vld [vmem:[%s1 + $0x230] sm:$0xf]
      %v431 = vld [vmem:[%s1 + $0x234] sm:$0xf]
      %v432 = vld [vmem:[%s1 + $0x238] sm:$0xf]
      %v433 = vld [vmem:[%s1 + $0x23c] sm:$0xf]
      %v434 = vld [vmem:[%s1 + $0x240] sm:$0xf]
      %v435 = vld [vmem:[%s1 + $0x244] sm:$0xf]
      %v436 = vld [vmem:[%s1 + $0x248] sm:$0xf]
      %v437 = vld [vmem:[%s1 + $0x24c] sm:$0xf]
      %v438 = vld [vmem:[%s1 + $0x250] sm:$0xf]
      %v439 = vld [vmem:[%s1 + $0x254] sm:$0xf]
      %v440 = vld [vmem:[%s1 + $0x258] sm:$0xf]
      %v441 = vld [vmem:[%s1 + $0x25c] sm:$0xf]
      %v442 = vld [vmem:[%s1 + $0x260] sm:$0xf]
      %v443 = vld [vmem:[%s1 + $0x264] sm:$0xf]
      %v444 = vld [vmem:[%s1 + $0x268] sm:$0xf]
      %v445 = vld [vmem:[%s1 + $0x26c] sm:$0xf]
      %v446 = vld [vmem:[%s1 + $0x270] sm:$0xf]
      %v447 = vld [vmem:[%s1 + $0x274] sm:$0xf]
      %v448 = vld [vmem:[%s1 + $0x278] sm:$0xf]
      %v449 = vld [vmem:[%s1 + $0x27c] sm:$0xf]
      %v450 = vld [vmem:[%s1 + $0x280] sm:$0xf]
      %v451 = vld [vmem:[%s1 + $0x284] sm:$0xf]
      %v452 = vld [vmem:[%s1 + $0x288] sm:$0xf]
      %v453 = vld [vmem:[%s1 + $0x28c] sm:$0xf]
      %v454 = vld [vmem:[%s1 + $0x290] sm:$0xf]
      %v455 = vld [vmem:[%s1 + $0x294] sm:$0xf]
      %v456 = vld [vmem:[%s1 + $0x298] sm:$0xf]
      %v457 = vld [vmem:[%s1 + $0x29c] sm:$0xf]
      %v458 = vld [vmem:[%s1 + $0x2a0] sm:$0xf]
      %v459 = vld [vmem:[%s1 + $0x2a4] sm:$0xf]
      %v460 = vld [vmem:[%s1 + $0x2a8] sm:$0xf]
      %v461 = vld [vmem:[%s1 + $0x2ac] sm:$0xf]
      %v462 = vld [vmem:[%s1 + $0x2b0] sm:$0xf]
      %v463 = vld [vmem:[%s1 + $0x2b4] sm:$0xf]
      %v464 = vld [vmem:[%s1 + $0x2b8] sm:$0xf]
      %v465 = vld [vmem:[%s1 + $0x2bc] sm:$0xf]
      %v466 = vld [vmem:[%s1 + $0x2c0] sm:$0xf]
      %v467 = vld [vmem:[%s1 + $0x2c4] sm:$0xf]
      %v468 = vld [vmem:[%s1 + $0x2c8] sm:$0xf]
      %v469 = vld [vmem:[%s1 + $0x2cc] sm:$0xf]
      %v470 = vld [vmem:[%s1 + $0x2d0] sm:$0xf]
      %v471 = vld [vmem:[%s1 + $0x2d4] sm:$0xf]
      %v472 = vld [vmem:[%s1 + $0x2d8] sm:$0xf]
      %v473 = vld [vmem:[%s1 + $0x2dc] sm:$0xf]
      %v474 = vld [vmem:[%s1 + $0x2e0] sm:$0xf]
      %v475 = vld [vmem:[%s1 + $0x2e4] sm:$0xf]
      %v476 = vld [vmem:[%s1 + $0x2e8] sm:$0xf]
      %v477 = vld [vmem:[%s1 + $0x2ec] sm:$0xf]
      %v478 = vld [vmem:[%s1 + $0x2f0] sm:$0xf]
      %v479 = vld [vmem:[%s1 + $0x2f4] sm:$0xf]
      %v480 = vld [vmem:[%s1 + $0x2f8] sm:$0xf]
      %v481 = vld [vmem:[%s1 + $0x2fc] sm:$0xf]
      %v482 = vld [vmem:[%s1 + $0x300] sm:$0xf]
      %v483 = vld [vmem:[%s1 + $0x304] sm:$0xf]
      %v484 = vld [vmem:[%s1 + $0x308] sm:$0xf]
      %v485 = vld [vmem:[%s1 + $0x30c] sm:$0xf]
      %v486 = vld [vmem:[%s1 + $0x310] sm:$0xf]
      %v487 = vld [vmem:[%s1 + $0x314] sm:$0xf]
      %v488 = vld [vmem:[%s1 + $0x318] sm:$0xf]
      %v489 = vld [vmem:[%s1 + $0x31c] sm:$0xf]
      %v490 = vld [vmem:[%s1 + $0x320] sm:$0xf]
      %v491 = vld [vmem:[%s1 + $0x324] sm:$0xf]
      %v492 = vld [vmem:[%s1 + $0x328] sm:$0xf]
      %v493 = vld [vmem:[%s1 + $0x32c] sm:$0xf]
      %v494 = vld [vmem:[%s1 + $0x330] sm:$0xf]
      %v495 = vld [vmem:[%s1 + $0x334] sm:$0xf]
      %v496 = vld [vmem:[%s1 + $0x338] sm:$0xf]
      %v497 = vld [vmem:[%s1 + $0x33c] sm:$0xf]
      %v498 = vld [vmem:[%s2] sm:$0xf]
      %v499 = vld [vmem:[%s2 + $0x4] sm:$0xf]
      %v500 = vld [vmem:[%s2 + $0x8] sm:$0xf]
      %v501 = vld [vmem:[%s2 + $0xc] sm:$0xf]
      %v502 = vld [vmem:[%s2 + $0x10] sm:$0xf]
      %v503 = vunpack.c.l.bf16 %v502
      %v504 = vlaneseq
      %v505 = vshrl.u32 %v504, 7
      %v506 = vsub.s32 0, %v505
      %v507 = vrot.slane %v503, %v506
      %v620 = vunpack.c.l.b16 %v178
      %v621 = vunpack.c.h.b16 %v178
      %v622 = vunpack.c.l.b16 %v179
      %v623 = vunpack.c.h.b16 %v179
      %v624 = vunpack.c.l.b16 %v180
      %v625 = vunpack.c.h.b16 %v180
      %v626 = vunpack.c.l.b16 %v181
      %v627 = vunpack.c.h.b16 %v181
      %v628 = vunpack.c.l.b16 %v182
      %v629 = vunpack.c.h.b16 %v182
      %v630 = vunpack.c.l.b16 %v183
      %v631 = vunpack.c.h.b16 %v183
      %v632 = vunpack.c.l.b16 %v184
      %v633 = vunpack.c.l.b16 %v185
      %v634 = vunpack.c.h.b16 %v185
      %v635 = vunpack.c.l.b16 %v186
      %v636 = vunpack.c.h.b16 %v186
      %v637 = vunpack.c.l.b16 %v187
      %v638 = vunpack.c.h.b16 %v187
      %v639 = vunpack.c.l.b16 %v188
      %v640 = vunpack.c.h.b16 %v188
      %v641 = vunpack.c.l.b16 %v189
      %v642 = vunpack.c.h.b16 %v189
      %v643 = vunpack.c.l.b16 %v190
      %v644 = vunpack.c.h.b16 %v190
      %v645 = vunpack.c.l.b16 %v191
      %v646 = vunpack.c.l.b16 %v192
      %v647 = vunpack.c.h.b16 %v192
      %v648 = vunpack.c.l.b16 %v193
      %v649 = vunpack.c.h.b16 %v193
      %v650 = vunpack.c.l.b16 %v194
      %v651 = vunpack.c.h.b16 %v194
      %v652 = vunpack.c.l.b16 %v195
      %v653 = vunpack.c.h.b16 %v195
      %v654 = vunpack.c.l.b16 %v196
      %v655 = vunpack.c.h.b16 %v196
      %v656 = vunpack.c.l.b16 %v197
      %v657 = vunpack.c.h.b16 %v197
      %v658 = vunpack.c.l.b16 %v198
      %v659 = vunpack.c.l.b16 %v199
      %v660 = vunpack.c.h.b16 %v199
      %v661 = vunpack.c.l.b16 %v200
      %v662 = vunpack.c.h.b16 %v200
      %v663 = vunpack.c.l.b16 %v201
      %v664 = vunpack.c.h.b16 %v201
      %v665 = vunpack.c.l.b16 %v202
      %v666 = vunpack.c.h.b16 %v202
      %v667 = vunpack.c.l.b16 %v203
      %v668 = vunpack.c.h.b16 %v203
      %v669 = vunpack.c.l.b16 %v204
      %v670 = vunpack.c.h.b16 %v204
      %v671 = vunpack.c.l.b16 %v205
      %v672 = vunpack.c.l.b16 %v206
      %v673 = vunpack.c.h.b16 %v206
      %v674 = vunpack.c.l.b16 %v207
      %v675 = vunpack.c.h.b16 %v207
      %v676 = vunpack.c.l.b16 %v208
      %v677 = vunpack.c.h.b16 %v208
      %v678 = vunpack.c.l.b16 %v209
      %v679 = vunpack.c.h.b16 %v209
      %v680 = vunpack.c.l.b16 %v210
      %v681 = vunpack.c.h.b16 %v210
      %v682 = vunpack.c.l.b16 %v211
      %v683 = vunpack.c.h.b16 %v211
      %v684 = vunpack.c.l.b16 %v212
      %v685 = vunpack.c.l.b16 %v213
      %v686 = vunpack.c.h.b16 %v213
      %v687 = vunpack.c.l.b16 %v214
      %v688 = vunpack.c.h.b16 %v214
      %v689 = vunpack.c.l.b16 %v215
      %v690 = vunpack.c.h.b16 %v215
      %v691 = vunpack.c.l.b16 %v216
      %v692 = vunpack.c.h.b16 %v216
      %v693 = vunpack.c.l.b16 %v217
      %v694 = vunpack.c.h.b16 %v217
      %v695 = vunpack.c.l.b16 %v218
      %v696 = vunpack.c.h.b16 %v218
      %v697 = vunpack.c.l.b16 %v219
      %v698 = vunpack.c.l.b16 %v220
      %v699 = vunpack.c.h.b16 %v220
      %v700 = vunpack.c.l.b16 %v221
      %v701 = vunpack.c.h.b16 %v221
      %v702 = vunpack.c.l.b16 %v222
      %v703 = vunpack.c.h.b16 %v222
      %v704 = vunpack.c.l.b16 %v223
      %v705 = vunpack.c.h.b16 %v223
      %v706 = vunpack.c.l.b16 %v224
      %v707 = vunpack.c.h.b16 %v224
      %v708 = vunpack.c.l.b16 %v225
      %v709 = vunpack.c.h.b16 %v225
      %v710 = vunpack.c.l.b16 %v226
      %v711 = vunpack.c.l.b16 %v227
      %v712 = vunpack.c.h.b16 %v227
      %v713 = vunpack.c.l.b16 %v228
      %v714 = vunpack.c.h.b16 %v228
      %v715 = vunpack.c.l.b16 %v229
      %v716 = vunpack.c.h.b16 %v229
      %v717 = vunpack.c.l.b16 %v230
      %v718 = vunpack.c.h.b16 %v230
      %v719 = vunpack.c.l.b16 %v231
      %v720 = vunpack.c.h.b16 %v231
      %v721 = vunpack.c.l.b16 %v232
      %v722 = vunpack.c.h.b16 %v232
      %v723 = vunpack.c.l.b16 %v233
      %v724 = vunpack.c.l.b16 %v234
      %v725 = vunpack.c.h.b16 %v234
      %v726 = vunpack.c.l.b16 %v235
      %v727 = vunpack.c.h.b16 %v235
      %v728 = vunpack.c.l.b16 %v236
      %v729 = vunpack.c.h.b16 %v236
      %v730 = vunpack.c.l.b16 %v237
      %v731 = vunpack.c.h.b16 %v237
      %v732 = vunpack.c.l.b16 %v238
      %v733 = vunpack.c.h.b16 %v238
      %v734 = vunpack.c.l.b16 %v239
      %v735 = vunpack.c.h.b16 %v239
      %v736 = vunpack.c.l.b16 %v240
      %v737 = vunpack.c.l.b16 %v241
      %v738 = vunpack.c.h.b16 %v241
      %v739 = vunpack.c.l.b16 %v242
      %v740 = vunpack.c.h.b16 %v242
      %v741 = vunpack.c.l.b16 %v243
      %v742 = vunpack.c.h.b16 %v243
      %v743 = vunpack.c.l.b16 %v244
      %v744 = vunpack.c.h.b16 %v244
      %v745 = vunpack.c.l.b16 %v245
      %v746 = vunpack.c.h.b16 %v245
      %v747 = vunpack.c.l.b16 %v246
      %v748 = vunpack.c.h.b16 %v246
      %v749 = vunpack.c.l.b16 %v247
      %v750 = vunpack.c.l.b16 %v248
      %v751 = vunpack.c.h.b16 %v248
      %v752 = vunpack.c.l.b16 %v249
      %v753 = vunpack.c.h.b16 %v249
      %v754 = vunpack.c.l.b16 %v250
      %v755 = vunpack.c.h.b16 %v250
      %v756 = vunpack.c.l.b16 %v251
      %v757 = vunpack.c.h.b16 %v251
      %v758 = vunpack.c.l.b16 %v252
      %v759 = vunpack.c.h.b16 %v252
      %v760 = vunpack.c.l.b16 %v253
      %v761 = vunpack.c.h.b16 %v253
      %v762 = vunpack.c.l.b16 %v254
      %v763 = vunpack.c.l.b16 %v255
      %v764 = vunpack.c.h.b16 %v255
      %v765 = vunpack.c.l.b16 %v256
      %v766 = vunpack.c.h.b16 %v256
      %v767 = vunpack.c.l.b16 %v257
      %v768 = vunpack.c.h.b16 %v257
      %v769 = vunpack.c.l.b16 %v258
      %v770 = vunpack.c.h.b16 %v258
      %v771 = vunpack.c.l.b16 %v259
      %v772 = vunpack.c.h.b16 %v259
      %v773 = vunpack.c.l.b16 %v260
      %v774 = vunpack.c.h.b16 %v260
      %v775 = vunpack.c.l.b16 %v261
      %v776 = vunpack.c.l.b16 %v262
      %v777 = vunpack.c.h.b16 %v262
      %v778 = vunpack.c.l.b16 %v263
      %v779 = vunpack.c.h.b16 %v263
      %v780 = vunpack.c.l.b16 %v264
      %v781 = vunpack.c.h.b16 %v264
      %v782 = vunpack.c.l.b16 %v265
      %v783 = vunpack.c.h.b16 %v265
      %v784 = vunpack.c.l.b16 %v266
      %v785 = vunpack.c.h.b16 %v266
      %v786 = vunpack.c.l.b16 %v267
      %v787 = vunpack.c.h.b16 %v267
      %v788 = vunpack.c.l.b16 %v268
      %v789 = vunpack.c.l.b16 %v269
      %v790 = vunpack.c.h.b16 %v269
      %v791 = vunpack.c.l.b16 %v270
      %v792 = vunpack.c.h.b16 %v270
      %v793 = vunpack.c.l.b16 %v271
      %v794 = vunpack.c.h.b16 %v271
      %v795 = vunpack.c.l.b16 %v272
      %v796 = vunpack.c.h.b16 %v272
      %v797 = vunpack.c.l.b16 %v273
      %v798 = vunpack.c.h.b16 %v273
      %v799 = vunpack.c.l.b16 %v274
      %v800 = vunpack.c.h.b16 %v274
      %v801 = vunpack.c.l.b16 %v275
      %v802 = vunpack.c.l.b16 %v276
      %v803 = vunpack.c.h.b16 %v276
      %v804 = vunpack.c.l.b16 %v277
      %v805 = vunpack.c.h.b16 %v277
      %v806 = vunpack.c.l.b16 %v278
      %v807 = vunpack.c.h.b16 %v278
      %v808 = vunpack.c.l.b16 %v279
      %v809 = vunpack.c.h.b16 %v279
      %v810 = vunpack.c.l.b16 %v280
      %v811 = vunpack.c.h.b16 %v280
      %v812 = vunpack.c.l.b16 %v281
      %v813 = vunpack.c.h.b16 %v281
      %v814 = vunpack.c.l.b16 %v282
      %v815 = vunpack.c.l.b16 %v283
      %v816 = vunpack.c.h.b16 %v283
      %v817 = vunpack.c.l.b16 %v284
      %v818 = vunpack.c.h.b16 %v284
      %v819 = vunpack.c.l.b16 %v285
      %v820 = vunpack.c.h.b16 %v285
      %v821 = vunpack.c.l.b16 %v286
      %v822 = vunpack.c.h.b16 %v286
      %v823 = vunpack.c.l.b16 %v287
      %v824 = vunpack.c.h.b16 %v287
      %v825 = vunpack.c.l.b16 %v288
      %v826 = vunpack.c.h.b16 %v288
      %v827 = vunpack.c.l.b16 %v289
      %v828 = vpack.c.b16 %v633, %v620
      %v829 = vpack.c.b16 %v634, %v621
      %v830 = vpack.c.b16 %v635, %v622
      %v831 = vpack.c.b16 %v636, %v623
      %v832 = vpack.c.b16 %v637, %v624
      %v833 = vpack.c.b16 %v638, %v625
      %v834 = vpack.c.b16 %v639, %v626
      %v835 = vpack.c.b16 %v640, %v627
      %v836 = vpack.c.b16 %v641, %v628
      %v837 = vpack.c.b16 %v642, %v629
      %v838 = vpack.c.b16 %v643, %v630
      %v839 = vpack.c.b16 %v644, %v631
      %v840 = vpack.c.b16 %v645, %v632
      %v841 = vpack.c.b16 %v659, %v646
      %v842 = vpack.c.b16 %v660, %v647
      %v843 = vpack.c.b16 %v661, %v648
      %v844 = vpack.c.b16 %v662, %v649
      %v845 = vpack.c.b16 %v663, %v650
      %v846 = vpack.c.b16 %v664, %v651
      %v847 = vpack.c.b16 %v665, %v652
      %v848 = vpack.c.b16 %v666, %v653
      %v849 = vpack.c.b16 %v667, %v654
      %v850 = vpack.c.b16 %v668, %v655
      %v851 = vpack.c.b16 %v669, %v656
      %v852 = vpack.c.b16 %v670, %v657
      %v853 = vpack.c.b16 %v671, %v658
      %v854 = vpack.c.b16 %v685, %v672
      %v855 = vpack.c.b16 %v686, %v673
      %v856 = vpack.c.b16 %v687, %v674
      %v857 = vpack.c.b16 %v688, %v675
      %v858 = vpack.c.b16 %v689, %v676
      %v859 = vpack.c.b16 %v690, %v677
      %v860 = vpack.c.b16 %v691, %v678
      %v861 = vpack.c.b16 %v692, %v679
      %v862 = vpack.c.b16 %v693, %v680
      %v863 = vpack.c.b16 %v694, %v681
      %v864 = vpack.c.b16 %v695, %v682
      %v865 = vpack.c.b16 %v696, %v683
      %v866 = vpack.c.b16 %v697, %v684
      %v867 = vpack.c.b16 %v711, %v698
      %v868 = vpack.c.b16 %v712, %v699
      %v869 = vpack.c.b16 %v713, %v700
      %v870 = vpack.c.b16 %v714, %v701
      %v871 = vpack.c.b16 %v715, %v702
      %v872 = vpack.c.b16 %v716, %v703
      %v873 = vpack.c.b16 %v717, %v704
      %v874 = vpack.c.b16 %v718, %v705
      %v875 = vpack.c.b16 %v719, %v706
      %v876 = vpack.c.b16 %v720, %v707
      %v877 = vpack.c.b16 %v721, %v708
      %v878 = vpack.c.b16 %v722, %v709
      %v879 = vpack.c.b16 %v723, %v710
      %v880 = vpack.c.b16 %v737, %v724
      %v881 = vpack.c.b16 %v738, %v725
      %v882 = vpack.c.b16 %v739, %v726
      %v883 = vpack.c.b16 %v740, %v727
      %v884 = vpack.c.b16 %v741, %v728
      %v885 = vpack.c.b16 %v742, %v729
      %v886 = vpack.c.b16 %v743, %v730
      %v887 = vpack.c.b16 %v744, %v731
      %v888 = vpack.c.b16 %v745, %v732
      %v889 = vpack.c.b16 %v746, %v733
      %v890 = vpack.c.b16 %v747, %v734
      %v891 = vpack.c.b16 %v748, %v735
      %v892 = vpack.c.b16 %v749, %v736
      %v893 = vpack.c.b16 %v763, %v750
      %v894 = vpack.c.b16 %v764, %v751
      %v895 = vpack.c.b16 %v765, %v752
      %v896 = vpack.c.b16 %v766, %v753
      %v897 = vpack.c.b16 %v767, %v754
      %v898 = vpack.c.b16 %v768, %v755
      %v899 = vpack.c.b16 %v769, %v756
      %v900 = vpack.c.b16 %v770, %v757
      %v901 = vpack.c.b16 %v771, %v758
      %v902 = vpack.c.b16 %v772, %v759
      %v903 = vpack.c.b16 %v773, %v760
      %v904 = vpack.c.b16 %v774, %v761
      %v905 = vpack.c.b16 %v775, %v762
      %v906 = vpack.c.b16 %v789, %v776
      %v907 = vpack.c.b16 %v790, %v777
      %v908 = vpack.c.b16 %v791, %v778
      %v909 = vpack.c.b16 %v792, %v779
      %v910 = vpack.c.b16 %v793, %v780
      %v911 = vpack.c.b16 %v794, %v781
      %v912 = vpack.c.b16 %v795, %v782
      %v913 = vpack.c.b16 %v796, %v783
      %v914 = vpack.c.b16 %v797, %v784
      %v915 = vpack.c.b16 %v798, %v785
      %v916 = vpack.c.b16 %v799, %v786
      %v917 = vpack.c.b16 %v800, %v787
      %v918 = vpack.c.b16 %v801, %v788
      %v919 = vpack.c.b16 %v815, %v802
      %v920 = vpack.c.b16 %v816, %v803
      %v921 = vpack.c.b16 %v817, %v804
      %v922 = vpack.c.b16 %v818, %v805
      %v923 = vpack.c.b16 %v819, %v806
      %v924 = vpack.c.b16 %v820, %v807
      %v925 = vpack.c.b16 %v821, %v808
      %v926 = vpack.c.b16 %v822, %v809
      %v927 = vpack.c.b16 %v823, %v810
      %v928 = vpack.c.b16 %v824, %v811
      %v929 = vpack.c.b16 %v825, %v812
      %v930 = vpack.c.b16 %v826, %v813
      %v931 = vpack.c.b16 %v827, %v814
      %v1244 = vunpack.c.l.b16 %v290
      %v1245 = vunpack.c.l.b16 %v291
      %v1246 = vunpack.c.l.b16 %v292
      %v1247 = vunpack.c.l.b16 %v293
      %v1248 = vunpack.c.l.b16 %v294
      %v1249 = vunpack.c.l.b16 %v295
      %v1250 = vunpack.c.l.b16 %v296
      %v1251 = vunpack.c.l.b16 %v297
      %v1252 = vunpack.c.l.b16 %v298
      %v1253 = vunpack.c.l.b16 %v299
      %v1254 = vunpack.c.l.b16 %v300
      %v1255 = vunpack.c.l.b16 %v301
      %v1256 = vunpack.c.l.b16 %v302
      %v1257 = vunpack.c.l.b16 %v303
      %v1258 = vunpack.c.l.b16 %v304
      %v1259 = vunpack.c.l.b16 %v305
      %v1260 = vunpack.c.l.b16 %v306
      %v1261 = vunpack.c.l.b16 %v307
      %v1262 = vunpack.c.l.b16 %v308
      %v1263 = vunpack.c.l.b16 %v309
      %v1264 = vunpack.c.l.b16 %v310
      %v1265 = vunpack.c.l.b16 %v311
      %v1266 = vunpack.c.l.b16 %v312
      %v1267 = vunpack.c.l.b16 %v313
      %v1268 = vunpack.c.l.b16 %v314
      %v1269 = vunpack.c.l.b16 %v315
      %v1270 = vunpack.c.l.b16 %v316
      %v1271 = vunpack.c.l.b16 %v317
      %v1272 = vunpack.c.l.b16 %v318
      %v1273 = vunpack.c.l.b16 %v319
      %v1274 = vunpack.c.l.b16 %v320
      %v1275 = vunpack.c.l.b16 %v321
      %v1276 = vunpack.c.l.b16 %v322
      %v1277 = vunpack.c.l.b16 %v323
      %v1278 = vunpack.c.l.b16 %v324
      %v1279 = vunpack.c.l.b16 %v325
      %v1280 = vunpack.c.l.b16 %v326
      %v1281 = vunpack.c.l.b16 %v327
      %v1282 = vunpack.c.l.b16 %v328
      %v1283 = vunpack.c.l.b16 %v329
      %v1284 = vunpack.c.l.b16 %v330
      %v1285 = vunpack.c.l.b16 %v331
      %v1286 = vunpack.c.l.b16 %v332
      %v1287 = vunpack.c.l.b16 %v333
      %v1288 = vunpack.c.l.b16 %v334
      %v1289 = vunpack.c.l.b16 %v335
      %v1290 = vunpack.c.l.b16 %v336
      %v1291 = vunpack.c.l.b16 %v337
      %v1292 = vunpack.c.l.b16 %v338
      %v1293 = vunpack.c.l.b16 %v339
      %v1294 = vunpack.c.l.b16 %v340
      %v1295 = vunpack.c.l.b16 %v341
      %v1296 = vunpack.c.l.b16 %v342
      %v1297 = vunpack.c.l.b16 %v343
      %v1298 = vunpack.c.l.b16 %v344
      %v1299 = vunpack.c.l.b16 %v345
      %v1300 = vunpack.c.l.b16 %v346
      %v1301 = vunpack.c.l.b16 %v347
      %v1302 = vunpack.c.l.b16 %v348
      %v1303 = vunpack.c.l.b16 %v349
      %v1304 = vunpack.c.l.b16 %v350
      %v1305 = vunpack.c.l.b16 %v351
      %v1306 = vunpack.c.l.b16 %v352
      %v1307 = vunpack.c.l.b16 %v353
      %v1308 = vunpack.c.l.b16 %v354
      %v1309 = vunpack.c.l.b16 %v355
      %v1310 = vunpack.c.l.b16 %v356
      %v1311 = vunpack.c.l.b16 %v357
      %v1312 = vunpack.c.l.b16 %v358
      %v1313 = vunpack.c.l.b16 %v359
      %v1314 = vunpack.c.l.b16 %v360
      %v1315 = vunpack.c.l.b16 %v361
      %v1316 = vunpack.c.l.b16 %v362
      %v1317 = vunpack.c.l.b16 %v363
      %v1318 = vunpack.c.l.b16 %v364
      %v1319 = vunpack.c.l.b16 %v365
      %v1320 = vunpack.c.l.b16 %v366
      %v1321 = vunpack.c.l.b16 %v367
      %v1322 = vunpack.c.l.b16 %v368
      %v1323 = vunpack.c.l.b16 %v369
      %v1324 = vunpack.c.l.b16 %v370
      %v1325 = vunpack.c.l.b16 %v371
      %v1326 = vunpack.c.l.b16 %v372
      %v1327 = vunpack.c.l.b16 %v373
      %v1328 = vunpack.c.l.b16 %v374
      %v1329 = vunpack.c.l.b16 %v375
      %v1330 = vunpack.c.l.b16 %v376
      %v1331 = vunpack.c.l.b16 %v377
      %v1332 = vunpack.c.l.b16 %v378
      %v1333 = vunpack.c.l.b16 %v379
      %v1334 = vunpack.c.l.b16 %v380
      %v1335 = vunpack.c.l.b16 %v381
      %v1336 = vunpack.c.l.b16 %v382
      %v1337 = vunpack.c.l.b16 %v383
      %v1338 = vunpack.c.l.b16 %v384
      %v1339 = vunpack.c.l.b16 %v385
      %v1340 = vunpack.c.l.b16 %v386
      %v1341 = vunpack.c.l.b16 %v387
      %v1342 = vunpack.c.l.b16 %v388
      %v1343 = vunpack.c.l.b16 %v389
      %v1344 = vunpack.c.l.b16 %v390
      %v1345 = vunpack.c.l.b16 %v391
      %v1346 = vunpack.c.l.b16 %v392
      %v1347 = vunpack.c.l.b16 %v393
      %v1348 = vunpack.c.l.b16 %v394
      %v1349 = vunpack.c.l.b16 %v395
      %v1350 = vunpack.c.l.b16 %v396
      %v1351 = vunpack.c.l.b16 %v397
      %v1352 = vunpack.c.l.b16 %v398
      %v1353 = vunpack.c.l.b16 %v399
      %v1354 = vunpack.c.l.b16 %v400
      %v1355 = vunpack.c.l.b16 %v401
      %v1356 = vunpack.c.l.b16 %v402
      %v1357 = vunpack.c.l.b16 %v403
      %v1358 = vunpack.c.l.b16 %v404
      %v1359 = vunpack.c.l.b16 %v405
      %v1360 = vunpack.c.l.b16 %v406
      %v1361 = vunpack.c.l.b16 %v407
      %v1362 = vunpack.c.l.b16 %v408
      %v1363 = vunpack.c.l.b16 %v409
      %v1364 = vunpack.c.l.b16 %v410
      %v1365 = vunpack.c.l.b16 %v411
      %v1366 = vunpack.c.l.b16 %v412
      %v1367 = vunpack.c.l.b16 %v413
      %v1368 = vunpack.c.l.b16 %v414
      %v1369 = vunpack.c.l.b16 %v415
      %v1370 = vunpack.c.l.b16 %v416
      %v1371 = vunpack.c.l.b16 %v417
      %v1372 = vunpack.c.l.b16 %v418
      %v1373 = vunpack.c.l.b16 %v419
      %v1374 = vunpack.c.l.b16 %v420
      %v1375 = vunpack.c.l.b16 %v421
      %v1376 = vunpack.c.l.b16 %v422
      %v1377 = vunpack.c.l.b16 %v423
      %v1378 = vunpack.c.l.b16 %v424
      %v1379 = vunpack.c.l.b16 %v425
      %v1380 = vunpack.c.l.b16 %v426
      %v1381 = vunpack.c.l.b16 %v427
      %v1382 = vunpack.c.l.b16 %v428
      %v1383 = vunpack.c.l.b16 %v429
      %v1384 = vunpack.c.l.b16 %v430
      %v1385 = vunpack.c.l.b16 %v431
      %v1386 = vunpack.c.l.b16 %v432
      %v1387 = vunpack.c.l.b16 %v433
      %v1388 = vunpack.c.l.b16 %v434
      %v1389 = vunpack.c.l.b16 %v435
      %v1390 = vunpack.c.l.b16 %v436
      %v1391 = vunpack.c.l.b16 %v437
      %v1392 = vunpack.c.l.b16 %v438
      %v1393 = vunpack.c.l.b16 %v439
      %v1394 = vunpack.c.l.b16 %v440
      %v1395 = vunpack.c.l.b16 %v441
      %v1396 = vunpack.c.l.b16 %v442
      %v1397 = vunpack.c.l.b16 %v443
      %v1398 = vunpack.c.l.b16 %v444
      %v1399 = vunpack.c.l.b16 %v445
      %v1400 = vunpack.c.l.b16 %v446
      %v1401 = vunpack.c.l.b16 %v447
      %v1402 = vunpack.c.l.b16 %v448
      %v1403 = vunpack.c.l.b16 %v449
      %v1404 = vunpack.c.l.b16 %v450
      %v1405 = vunpack.c.l.b16 %v451
      %v1406 = vunpack.c.l.b16 %v452
      %v1407 = vunpack.c.l.b16 %v453
      %v1408 = vunpack.c.l.b16 %v454
      %v1409 = vunpack.c.l.b16 %v455
      %v1410 = vunpack.c.l.b16 %v456
      %v1411 = vunpack.c.l.b16 %v457
      %v1412 = vunpack.c.l.b16 %v458
      %v1413 = vunpack.c.l.b16 %v459
      %v1414 = vunpack.c.l.b16 %v460
      %v1415 = vunpack.c.l.b16 %v461
      %v1416 = vunpack.c.l.b16 %v462
      %v1417 = vunpack.c.l.b16 %v463
      %v1418 = vunpack.c.l.b16 %v464
      %v1419 = vunpack.c.l.b16 %v465
      %v1420 = vunpack.c.l.b16 %v466
      %v1421 = vunpack.c.l.b16 %v467
      %v1422 = vunpack.c.l.b16 %v468
      %v1423 = vunpack.c.l.b16 %v469
      %v1424 = vunpack.c.l.b16 %v470
      %v1425 = vunpack.c.l.b16 %v471
      %v1426 = vunpack.c.l.b16 %v472
      %v1427 = vunpack.c.l.b16 %v473
      %v1428 = vunpack.c.l.b16 %v474
      %v1429 = vunpack.c.l.b16 %v475
      %v1430 = vunpack.c.l.b16 %v476
      %v1431 = vunpack.c.l.b16 %v477
      %v1432 = vunpack.c.l.b16 %v478
      %v1433 = vunpack.c.l.b16 %v479
      %v1434 = vunpack.c.l.b16 %v480
      %v1435 = vunpack.c.l.b16 %v481
      %v1436 = vunpack.c.l.b16 %v482
      %v1437 = vunpack.c.l.b16 %v483
      %v1438 = vunpack.c.l.b16 %v484
      %v1439 = vunpack.c.l.b16 %v485
      %v1440 = vunpack.c.l.b16 %v486
      %v1441 = vunpack.c.l.b16 %v487
      %v1442 = vunpack.c.l.b16 %v488
      %v1443 = vunpack.c.l.b16 %v489
      %v1444 = vunpack.c.l.b16 %v490
      %v1445 = vunpack.c.l.b16 %v491
      %v1446 = vunpack.c.l.b16 %v492
      %v1447 = vunpack.c.l.b16 %v493
      %v1448 = vunpack.c.l.b16 %v494
      %v1449 = vunpack.c.l.b16 %v495
      %v1450 = vunpack.c.l.b16 %v496
      %v1451 = vunpack.c.l.b16 %v497
      %v1452 = vpack.c.b16 %v1245, %v1244
      %v1453 = vpack.c.b16 %v1247, %v1246
      %v1454 = vpack.c.b16 %v1249, %v1248
      %v1455 = vpack.c.b16 %v1251, %v1250
      %v1456 = vpack.c.b16 %v1253, %v1252
      %v1457 = vpack.c.b16 %v1255, %v1254
      %v1458 = vpack.c.b16 %v1257, %v1256
      %v1459 = vpack.c.b16 %v1259, %v1258
      %v1460 = vpack.c.b16 %v1261, %v1260
      %v1461 = vpack.c.b16 %v1263, %v1262
      %v1462 = vpack.c.b16 %v1265, %v1264
      %v1463 = vpack.c.b16 %v1267, %v1266
      %v1464 = vpack.c.b16 %v1269, %v1268
      %v1465 = vpack.c.b16 %v1271, %v1270
      %v1466 = vpack.c.b16 %v1273, %v1272
      %v1467 = vpack.c.b16 %v1275, %v1274
      %v1468 = vpack.c.b16 %v1277, %v1276
      %v1469 = vpack.c.b16 %v1279, %v1278
      %v1470 = vpack.c.b16 %v1281, %v1280
      %v1471 = vpack.c.b16 %v1283, %v1282
      %v1472 = vpack.c.b16 %v1285, %v1284
      %v1473 = vpack.c.b16 %v1287, %v1286
      %v1474 = vpack.c.b16 %v1289, %v1288
      %v1475 = vpack.c.b16 %v1291, %v1290
      %v1476 = vpack.c.b16 %v1293, %v1292
      %v1477 = vpack.c.b16 %v1295, %v1294
      %v1478 = vpack.c.b16 %v1297, %v1296
      %v1479 = vpack.c.b16 %v1299, %v1298
      %v1480 = vpack.c.b16 %v1301, %v1300
      %v1481 = vpack.c.b16 %v1303, %v1302
      %v1482 = vpack.c.b16 %v1305, %v1304
      %v1483 = vpack.c.b16 %v1307, %v1306
      %v1484 = vpack.c.b16 %v1309, %v1308
      %v1485 = vpack.c.b16 %v1311, %v1310
      %v1486 = vpack.c.b16 %v1313, %v1312
      %v1487 = vpack.c.b16 %v1315, %v1314
      %v1488 = vpack.c.b16 %v1317, %v1316
      %v1489 = vpack.c.b16 %v1319, %v1318
      %v1490 = vpack.c.b16 %v1321, %v1320
      %v1491 = vpack.c.b16 %v1323, %v1322
      %v1492 = vpack.c.b16 %v1325, %v1324
      %v1493 = vpack.c.b16 %v1327, %v1326
      %v1494 = vpack.c.b16 %v1329, %v1328
      %v1495 = vpack.c.b16 %v1331, %v1330
      %v1496 = vpack.c.b16 %v1333, %v1332
      %v1497 = vpack.c.b16 %v1335, %v1334
      %v1498 = vpack.c.b16 %v1337, %v1336
      %v1499 = vpack.c.b16 %v1339, %v1338
      %v1500 = vpack.c.b16 %v1341, %v1340
      %v1501 = vpack.c.b16 %v1343, %v1342
      %v1502 = vpack.c.b16 %v1345, %v1344
      %v1503 = vpack.c.b16 %v1347, %v1346
      %v1504 = vpack.c.b16 %v1349, %v1348
      %v1505 = vpack.c.b16 %v1351, %v1350
      %v1506 = vpack.c.b16 %v1353, %v1352
      %v1507 = vpack.c.b16 %v1355, %v1354
      %v1508 = vpack.c.b16 %v1357, %v1356
      %v1509 = vpack.c.b16 %v1359, %v1358
      %v1510 = vpack.c.b16 %v1361, %v1360
      %v1511 = vpack.c.b16 %v1363, %v1362
      %v1512 = vpack.c.b16 %v1365, %v1364
      %v1513 = vpack.c.b16 %v1367, %v1366
      %v1514 = vpack.c.b16 %v1369, %v1368
      %v1515 = vpack.c.b16 %v1371, %v1370
      %v1516 = vpack.c.b16 %v1373, %v1372
      %v1517 = vpack.c.b16 %v1375, %v1374
      %v1518 = vpack.c.b16 %v1377, %v1376
      %v1519 = vpack.c.b16 %v1379, %v1378
      %v1520 = vpack.c.b16 %v1381, %v1380
      %v1521 = vpack.c.b16 %v1383, %v1382
      %v1522 = vpack.c.b16 %v1385, %v1384
      %v1523 = vpack.c.b16 %v1387, %v1386
      %v1524 = vpack.c.b16 %v1389, %v1388
      %v1525 = vpack.c.b16 %v1391, %v1390
      %v1526 = vpack.c.b16 %v1393, %v1392
      %v1527 = vpack.c.b16 %v1395, %v1394
      %v1528 = vpack.c.b16 %v1397, %v1396
      %v1529 = vpack.c.b16 %v1399, %v1398
      %v1530 = vpack.c.b16 %v1401, %v1400
      %v1531 = vpack.c.b16 %v1403, %v1402
      %v1532 = vpack.c.b16 %v1405, %v1404
      %v1533 = vpack.c.b16 %v1407, %v1406
      %v1534 = vpack.c.b16 %v1409, %v1408
      %v1535 = vpack.c.b16 %v1411, %v1410
      %v1536 = vpack.c.b16 %v1413, %v1412
      %v1537 = vpack.c.b16 %v1415, %v1414
      %v1538 = vpack.c.b16 %v1417, %v1416
      %v1539 = vpack.c.b16 %v1419, %v1418
      %v1540 = vpack.c.b16 %v1421, %v1420
      %v1541 = vpack.c.b16 %v1423, %v1422
      %v1542 = vpack.c.b16 %v1425, %v1424
      %v1543 = vpack.c.b16 %v1427, %v1426
      %v1544 = vpack.c.b16 %v1429, %v1428
      %v1545 = vpack.c.b16 %v1431, %v1430
      %v1546 = vpack.c.b16 %v1433, %v1432
      %v1547 = vpack.c.b16 %v1435, %v1434
      %v1548 = vpack.c.b16 %v1437, %v1436
      %v1549 = vpack.c.b16 %v1439, %v1438
      %v1550 = vpack.c.b16 %v1441, %v1440
      %v1551 = vpack.c.b16 %v1443, %v1442
      %v1552 = vpack.c.b16 %v1445, %v1444
      %v1553 = vpack.c.b16 %v1447, %v1446
      %v1554 = vpack.c.b16 %v1449, %v1448
      %v1555 = vpack.c.b16 %v1451, %v1450
      %1660 = vmatprep.subr.bf16.mxu0 0
      %1661 = vmatpush1.bf16.msra.mxu0 %v1452
      %1662 = vmatprep.subr.bf16.mxu0 0
      %1663 = vmatpush1.bf16.msra.mxu0 %v1453
      %1664 = vmatprep.subr.bf16.mxu0 0
      %1665 = vmatpush1.bf16.msra.mxu0 %v1454
      %1666 = vmatprep.subr.bf16.mxu0 0
      %1667 = vmatpush1.bf16.msra.mxu0 %v1455
      %1668 = vmatprep.subr.bf16.mxu0 0
      %1669 = vmatpush1.bf16.msra.mxu0 %v1456
      %1670 = vmatprep.subr.bf16.mxu0 0
      %1671 = vmatpush1.bf16.msra.mxu0 %v1457
      %1672 = vmatprep.subr.bf16.mxu0 0
      %1673 = vmatpush1.bf16.msra.mxu0 %v1458
      %1674 = vmatprep.subr.bf16.mxu0 0
      %1675 = vmatpush1.bf16.msra.mxu0 %v1459
      %1676 = vmatprep.subr.bf16.mxu0 0
      %1677 = vmatpush1.bf16.msra.mxu0 %v1460
      %1678 = vmatprep.subr.bf16.mxu0 0
      %1679 = vmatpush1.bf16.msra.mxu0 %v1461
      %1680 = vmatprep.subr.bf16.mxu0 0
      %1681 = vmatpush1.bf16.msra.mxu0 %v1462
      %1682 = vmatprep.subr.bf16.mxu0 0
      %1683 = vmatpush1.bf16.msra.mxu0 %v1463
      %1684 = vmatprep.subr.bf16.mxu0 0
      %1685 = vmatpush1.bf16.msra.mxu0 %v1464
      %1686 = vmatprep.subr.bf16.mxu0 0
      %1687 = vmatpush1.bf16.msra.mxu0 %v1465
      %1688 = vmatprep.subr.bf16.mxu0 0
      %1689 = vmatpush1.bf16.msra.mxu0 %v1466
      %1690 = vmatprep.subr.bf16.mxu0 0
      %1691 = vmatpush1.bf16.msra.mxu0 %v1467
      %1692 = vmatprep.mubr.bf16.mxu0 %v829
      %1693 = vmatmul.mubr.bf16.gmra.mrb[0].mxu0 %v828
      %v1694 = vpop.f32.mrb[0].mxu0
      %v1695 = vadd.f32 %v507, %v1694
      %v1696 = vpop.f32.mrb[0].mxu0
      %v1697 = vpop.f32.mrb[0].mxu0
      %v1698 = vadd.f32 %v507, %v1697
      %v1699 = vpop.f32.mrb[0].mxu0
      %1700 = vmatprep.mubr.bf16.mxu0 %v842
      %1701 = vmatmul.mubr.bf16.gmra.mrb[0].mxu0 %v841
      %v1702 = vpop.f32.mrb[0].mxu0
      %v1703 = vadd.f32 %v507, %v1702
      %v1704 = vpop.f32.mrb[0].mxu0
      %v1705 = vpop.f32.mrb[0].mxu0
      %v1706 = vadd.f32 %v507, %v1705
      %v1707 = vpop.f32.mrb[0].mxu0
      %1708 = vmatprep.mubr.bf16.mxu0 %v855
      %1709 = vmatmul.mubr.bf16.gmra.mrb[0].mxu0 %v854
      %v1710 = vpop.f32.mrb[0].mxu0
      %v1711 = vadd.f32 %v507, %v1710
      %v1712 = vpop.f32.mrb[0].mxu0
      %v1713 = vpop.f32.mrb[0].mxu0
      %v1714 = vadd.f32 %v507, %v1713
      %v1715 = vpop.f32.mrb[0].mxu0
      %1716 = vmatprep.mubr.bf16.mxu0 %v868
      %1717 = vmatmul.mubr.bf16.gmra.mrb[0].mxu0 %v867
      %v1718 = vpop.f32.mrb[0].mxu0
      %v1719 = vadd.f32 %v507, %v1718
      %v1720 = vpop.f32.mrb[0].mxu0
      %v1721 = vpop.f32.mrb[0].mxu0
      %v1722 = vadd.f32 %v507, %v1721
      %v1723 = vpop.f32.mrb[0].mxu0
      %1724 = vmatprep.mubr.bf16.mxu0 %v881
      %1725 = vmatmul.mubr.bf16.gmra.mrb[0].mxu0 %v880
      %v1726 = vpop.f32.mrb[0].mxu0
      %v1727 = vadd.f32 %v507, %v1726
      %v1728 = vpop.f32.mrb[0].mxu0
      %v1729 = vpop.f32.mrb[0].mxu0
      %v1730 = vadd.f32 %v507, %v1729
      %v1731 = vpop.f32.mrb[0].mxu0
      %1732 = vmatprep.mubr.bf16.mxu0 %v894
      %1733 = vmatmul.mubr.bf16.gmra.mrb[0].mxu0 %v893
      %v1734 = vpop.f32.mrb[0].mxu0
      %v1735 = vadd.f32 %v507, %v1734
      %v1736 = vpop.f32.mrb[0].mxu0
      %v1737 = vpop.f32.mrb[0].mxu0
      %v1738 = vadd.f32 %v507, %v1737
      %v1739 = vpop.f32.mrb[0].mxu0
      %1740 = vmatprep.mubr.bf16.mxu0 %v907
      %1741 = vmatmul.mubr.bf16.gmra.mrb[0].mxu0 %v906
      %v1742 = vpop.f32.mrb[0].mxu0
      %v1743 = vadd.f32 %v507, %v1742
      %v1744 = vpop.f32.mrb[0].mxu0
      %v1745 = vpop.f32.mrb[0].mxu0
      %v1746 = vadd.f32 %v507, %v1745
      %v1747 = vpop.f32.mrb[0].mxu0
      %1748 = vmatprep.mubr.bf16.mxu0 %v920
      %1749 = vmatmul.mubr.bf16.gmra.mrb[0].mxu0 %v919
      %v1750 = vpop.f32.mrb[0].mxu0
      %v1751 = vadd.f32 %v507, %v1750
      %v1752 = vpop.f32.mrb[0].mxu0
      %v1753 = vpop.f32.mrb[0].mxu0
      %v1754 = vadd.f32 %v507, %v1753
      %v1755 = vpop.f32.mrb[0].mxu0
      %1756 = vdwg.mxu0
      %1757 = vmatprep.subr.bf16.mxu0 0
      %1758 = vmatpush1.bf16.msra.mxu0 %v1468
      %1759 = vmatprep.subr.bf16.mxu0 0
      %1760 = vmatpush1.bf16.msra.mxu0 %v1469
      %1761 = vmatprep.subr.bf16.mxu0 0
      %1762 = vmatpush1.bf16.msra.mxu0 %v1470
      %1763 = vmatprep.subr.bf16.mxu0 0
      %1764 = vmatpush1.bf16.msra.mxu0 %v1471
      %1765 = vmatprep.subr.bf16.mxu0 0
      %1766 = vmatpush1.bf16.msra.mxu0 %v1472
      %1767 = vmatprep.subr.bf16.mxu0 0
      %1768 = vmatpush1.bf16.msra.mxu0 %v1473
      %1769 = vmatprep.subr.bf16.mxu0 0
      %1770 = vmatpush1.bf16.msra.mxu0 %v1474
      %1771 = vmatprep.subr.bf16.mxu0 0
      %1772 = vmatpush1.bf16.msra.mxu0 %v1475
      %1773 = vmatprep.subr.bf16.mxu0 0
      %1774 = vmatpush1.bf16.msra.mxu0 %v1476
      %1775 = vmatprep.subr.bf16.mxu0 0
      %1776 = vmatpush1.bf16.msra.mxu0 %v1477
      %1777 = vmatprep.subr.bf16.mxu0 0
      %1778 = vmatpush1.bf16.msra.mxu0 %v1478
      %1779 = vmatprep.subr.bf16.mxu0 0
      %1780 = vmatpush1.bf16.msra.mxu0 %v1479
      %1781 = vmatprep.subr.bf16.mxu0 0
      %1782 = vmatpush1.bf16.msra.mxu0 %v1480
      %1783 = vmatprep.subr.bf16.mxu0 0
      %1784 = vmatpush1.bf16.msra.mxu0 %v1481
      %1785 = vmatprep.subr.bf16.mxu0 0
      %1786 = vmatpush1.bf16.msra.mxu0 %v1482
      %1787 = vmatprep.subr.bf16.mxu0 0
      %1788 = vmatpush1.bf16.msra.mxu0 %v1483
      %1789 = vmatprep.mubr.bf16.mxu0 %v831
      %1790 = vmatmul.mubr.bf16.gmra.mrb[0].mxu0 %v830
      %v1791 = vpop.f32.mrb[0].mxu0
      %v1792 = vadd.f32 %v1695, %v1791
      %v1793 = vpop.f32.mrb[0].mxu0
      %v1794 = vpop.f32.mrb[0].mxu0
      %v1795 = vadd.f32 %v1698, %v1794
      %v1796 = vpop.f32.mrb[0].mxu0
      %1797 = vmatprep.mubr.bf16.mxu0 %v844
      %1798 = vmatmul.mubr.bf16.gmra.mrb[0].mxu0 %v843
      %v1799 = vpop.f32.mrb[0].mxu0
      %v1800 = vadd.f32 %v1703, %v1799
      %v1801 = vpop.f32.mrb[0].mxu0
      %v1802 = vpop.f32.mrb[0].mxu0
      %v1803 = vadd.f32 %v1706, %v1802
      %v1804 = vpop.f32.mrb[0].mxu0
      %1805 = vmatprep.mubr.bf16.mxu0 %v857
      %1806 = vmatmul.mubr.bf16.gmra.mrb[0].mxu0 %v856
      %v1807 = vpop.f32.mrb[0].mxu0
      %v1808 = vadd.f32 %v1711, %v1807
      %v1809 = vpop.f32.mrb[0].mxu0
      %v1810 = vpop.f32.mrb[0].mxu0
      %v1811 = vadd.f32 %v1714, %v1810
      %v1812 = vpop.f32.mrb[0].mxu0
      %1813 = vmatprep.mubr.bf16.mxu0 %v870
      %1814 = vmatmul.mubr.bf16.gmra.mrb[0].mxu0 %v869
      %v1815 = vpop.f32.mrb[0].mxu0
      %v1816 = vadd.f32 %v1719, %v1815
      %v1817 = vpop.f32.mrb[0].mxu0
      %v1818 = vpop.f32.mrb[0].mxu0
      %v1819 = vadd.f32 %v1722, %v1818
      %v1820 = vpop.f32.mrb[0].mxu0
      %1821 = vmatprep.mubr.bf16.mxu0 %v883
      %1822 = vmatmul.mubr.bf16.gmra.mrb[0].mxu0 %v882
      %v1823 = vpop.f32.mrb[0].mxu0
      %v1824 = vadd.f32 %v1727, %v1823
      %v1825 = vpop.f32.mrb[0].mxu0
      %v1826 = vpop.f32.mrb[0].mxu0
      %v1827 = vadd.f32 %v1730, %v1826
      %v1828 = vpop.f32.mrb[0].mxu0
      %1829 = vmatprep.mubr.bf16.mxu0 %v896
      %1830 = vmatmul.mubr.bf16.gmra.mrb[0].mxu0 %v895
      %v1831 = vpop.f32.mrb[0].mxu0
      %v1832 = vadd.f32 %v1735, %v1831
      %v1833 = vpop.f32.mrb[0].mxu0
      %v1834 = vpop.f32.mrb[0].mxu0
      %v1835 = vadd.f32 %v1738, %v1834
      %v1836 = vpop.f32.mrb[0].mxu0
      %1837 = vmatprep.mubr.bf16.mxu0 %v909
      %1838 = vmatmul.mubr.bf16.gmra.mrb[0].mxu0 %v908
      %v1839 = vpop.f32.mrb[0].mxu0
      %v1840 = vadd.f32 %v1743, %v1839
      %v1841 = vpop.f32.mrb[0].mxu0
      %v1842 = vpop.f32.mrb[0].mxu0
      %v1843 = vadd.f32 %v1746, %v1842
      %v1844 = vpop.f32.mrb[0].mxu0
      %1845 = vmatprep.mubr.bf16.mxu0 %v922
      %1846 = vmatmul.mubr.bf16.gmra.mrb[0].mxu0 %v921
      %v1847 = vpop.f32.mrb[0].mxu0
      %v1848 = vadd.f32 %v1751, %v1847
      %v1849 = vpop.f32.mrb[0].mxu0
      %v1850 = vpop.f32.mrb[0].mxu0
      %v1851 = vadd.f32 %v1754, %v1850
      %v1852 = vpop.f32.mrb[0].mxu0
      %1853 = vdwg.mxu0
      %1854 = vmatprep.subr.bf16.mxu0 0
      %1855 = vmatpush1.bf16.msra.mxu0 %v1484
      %1856 = vmatprep.subr.bf16.mxu0 0
      %1857 = vmatpush1.bf16.msra.mxu0 %v1485
      %1858 = vmatprep.subr.bf16.mxu0 0
      %1859 = vmatpush1.bf16.msra.mxu0 %v1486
      %1860 = vmatprep.subr.bf16.mxu0 0
      %1861 = vmatpush1.bf16.msra.mxu0 %v1487
      %1862 = vmatprep.subr.bf16.mxu0 0
      %1863 = vmatpush1.bf16.msra.mxu0 %v1488
      %1864 = vmatprep.subr.bf16.mxu0 0
      %1865 = vmatpush1.bf16.msra.mxu0 %v1489
      %1866 = vmatprep.subr.bf16.mxu0 0
      %1867 = vmatpush1.bf16.msra.mxu0 %v1490
      %1868 = vmatprep.subr.bf16.mxu0 0
      %1869 = vmatpush1.bf16.msra.mxu0 %v1491
      %1870 = vmatprep.subr.bf16.mxu0 0
      %1871 = vmatpush1.bf16.msra.mxu0 %v1492
      %1872 = vmatprep.subr.bf16.mxu0 0
      %1873 = vmatpush1.bf16.msra.mxu0 %v1493
      %1874 = vmatprep.subr.bf16.mxu0 0
      %1875 = vmatpush1.bf16.msra.mxu0 %v1494
      %1876 = vmatprep.subr.bf16.mxu0 0
      %1877 = vmatpush1.bf16.msra.mxu0 %v1495
      %1878 = vmatprep.subr.bf16.mxu0 0
      %1879 = vmatpush1.bf16.msra.mxu0 %v1496
      %1880 = vmatprep.subr.bf16.mxu0 0
      %1881 = vmatpush1.bf16.msra.mxu0 %v1497
      %1882 = vmatprep.subr.bf16.mxu0 0
      %1883 = vmatpush1.bf16.msra.mxu0 %v1498
      %1884 = vmatprep.subr.bf16.mxu0 0
      %1885 = vmatpush1.bf16.msra.mxu0 %v1499
      %1886 = vmatprep.mubr.bf16.mxu0 %v833
      %1887 = vmatmul.mubr.bf16.gmra.mrb[0].mxu0 %v832
      %v1888 = vpop.f32.mrb[0].mxu0
      %v1889 = vadd.f32 %v1792, %v1888
      %v1890 = vpop.f32.mrb[0].mxu0
      %v1891 = vpop.f32.mrb[0].mxu0
      %v1892 = vadd.f32 %v1795, %v1891
      %v1893 = vpop.f32.mrb[0].mxu0
      %1894 = vmatprep.mubr.bf16.mxu0 %v846
      %1895 = vmatmul.mubr.bf16.gmra.mrb[0].mxu0 %v845
      %v1896 = vpop.f32.mrb[0].mxu0
      %v1897 = vadd.f32 %v1800, %v1896
      %v1898 = vpop.f32.mrb[0].mxu0
      %v1899 = vpop.f32.mrb[0].mxu0
      %v1900 = vadd.f32 %v1803, %v1899
      %v1901 = vpop.f32.mrb[0].mxu0
      %1902 = vmatprep.mubr.bf16.mxu0 %v859
      %1903 = vmatmul.mubr.bf16.gmra.mrb[0].mxu0 %v858
      %v1904 = vpop.f32.mrb[0].mxu0
      %v1905 = vadd.f32 %v1808, %v1904
      %v1906 = vpop.f32.mrb[0].mxu0
      %v1907 = vpop.f32.mrb[0].mxu0
      %v1908 = vadd.f32 %v1811, %v1907
      %v1909 = vpop.f32.mrb[0].mxu0
      %1910 = vmatprep.mubr.bf16.mxu0 %v872
      %1911 = vmatmul.mubr.bf16.gmra.mrb[0].mxu0 %v871
      %v1912 = vpop.f32.mrb[0].mxu0
      %v1913 = vadd.f32 %v1816, %v1912
      %v1914 = vpop.f32.mrb[0].mxu0
      %v1915 = vpop.f32.mrb[0].mxu0
      %v1916 = vadd.f32 %v1819, %v1915
      %v1917 = vpop.f32.mrb[0].mxu0
      %1918 = vmatprep.mubr.bf16.mxu0 %v885
      %1919 = vmatmul.mubr.bf16.gmra.mrb[0].mxu0 %v884
      %v1920 = vpop.f32.mrb[0].mxu0
      %v1921 = vadd.f32 %v1824, %v1920
      %v1922 = vpop.f32.mrb[0].mxu0
      %v1923 = vpop.f32.mrb[0].mxu0
      %v1924 = vadd.f32 %v1827, %v1923
      %v1925 = vpop.f32.mrb[0].mxu0
      %1926 = vmatprep.mubr.bf16.mxu0 %v898
      %1927 = vmatmul.mubr.bf16.gmra.mrb[0].mxu0 %v897
      %v1928 = vpop.f32.mrb[0].mxu0
      %v1929 = vadd.f32 %v1832, %v1928
      %v1930 = vpop.f32.mrb[0].mxu0
      %v1931 = vpop.f32.mrb[0].mxu0
      %v1932 = vadd.f32 %v1835, %v1931
      %v1933 = vpop.f32.mrb[0].mxu0
      %1934 = vmatprep.mubr.bf16.mxu0 %v911
      %1935 = vmatmul.mubr.bf16.gmra.mrb[0].mxu0 %v910
      %v1936 = vpop.f32.mrb[0].mxu0
      %v1937 = vadd.f32 %v1840, %v1936
      %v1938 = vpop.f32.mrb[0].mxu0
      %v1939 = vpop.f32.mrb[0].mxu0
      %v1940 = vadd.f32 %v1843, %v1939
      %v1941 = vpop.f32.mrb[0].mxu0
      %1942 = vmatprep.mubr.bf16.mxu0 %v924
      %1943 = vmatmul.mubr.bf16.gmra.mrb[0].mxu0 %v923
      %v1944 = vpop.f32.mrb[0].mxu0
      %v1945 = vadd.f32 %v1848, %v1944
      %v1946 = vpop.f32.mrb[0].mxu0
      %v1947 = vpop.f32.mrb[0].mxu0
      %v1948 = vadd.f32 %v1851, %v1947
      %v1949 = vpop.f32.mrb[0].mxu0
      %1950 = vdwg.mxu0
      %1951 = vmatprep.subr.bf16.mxu0 0
      %1952 = vmatpush1.bf16.msra.mxu0 %v1500
      %1953 = vmatprep.subr.bf16.mxu0 0
      %1954 = vmatpush1.bf16.msra.mxu0 %v1501
      %1955 = vmatprep.subr.bf16.mxu0 0
      %1956 = vmatpush1.bf16.msra.mxu0 %v1502
      %1957 = vmatprep.subr.bf16.mxu0 0
      %1958 = vmatpush1.bf16.msra.mxu0 %v1503
      %1959 = vmatprep.subr.bf16.mxu0 0
      %1960 = vmatpush1.bf16.msra.mxu0 %v1504
      %1961 = vmatprep.subr.bf16.mxu0 0
      %1962 = vmatpush1.bf16.msra.mxu0 %v1505
      %1963 = vmatprep.subr.bf16.mxu0 0
      %1964 = vmatpush1.bf16.msra.mxu0 %v1506
      %1965 = vmatprep.subr.bf16.mxu0 0
      %1966 = vmatpush1.bf16.msra.mxu0 %v1507
      %1967 = vmatprep.subr.bf16.mxu0 0
      %1968 = vmatpush1.bf16.msra.mxu0 %v1508
      %1969 = vmatprep.subr.bf16.mxu0 0
      %1970 = vmatpush1.bf16.msra.mxu0 %v1509
      %1971 = vmatprep.subr.bf16.mxu0 0
      %1972 = vmatpush1.bf16.msra.mxu0 %v1510
      %1973 = vmatprep.subr.bf16.mxu0 0
      %1974 = vmatpush1.bf16.msra.mxu0 %v1511
      %1975 = vmatprep.subr.bf16.mxu0 0
      %1976 = vmatpush1.bf16.msra.mxu0 %v1512
      %1977 = vmatprep.subr.bf16.mxu0 0
      %1978 = vmatpush1.bf16.msra.mxu0 %v1513
      %1979 = vmatprep.subr.bf16.mxu0 0
      %1980 = vmatpush1.bf16.msra.mxu0 %v1514
      %1981 = vmatprep.subr.bf16.mxu0 0
      %1982 = vmatpush1.bf16.msra.mxu0 %v1515
      %1983 = vmatprep.mubr.bf16.mxu0 %v835
      %1984 = vmatmul.mubr.bf16.gmra.mrb[0].mxu0 %v834
      %v1985 = vpop.f32.mrb[0].mxu0
      %v1986 = vadd.f32 %v1889, %v1985
      %v1987 = vpop.f32.mrb[0].mxu0
      %v1988 = vpop.f32.mrb[0].mxu0
      %v1989 = vadd.f32 %v1892, %v1988
      %v1990 = vpop.f32.mrb[0].mxu0
      %1991 = vmatprep.mubr.bf16.mxu0 %v848
      %1992 = vmatmul.mubr.bf16.gmra.mrb[0].mxu0 %v847
      %v1993 = vpop.f32.mrb[0].mxu0
      %v1994 = vadd.f32 %v1897, %v1993
      %v1995 = vpop.f32.mrb[0].mxu0
      %v1996 = vpop.f32.mrb[0].mxu0
      %v1997 = vadd.f32 %v1900, %v1996
      %v1998 = vpop.f32.mrb[0].mxu0
      %1999 = vmatprep.mubr.bf16.mxu0 %v861
      %2000 = vmatmul.mubr.bf16.gmra.mrb[0].mxu0 %v860
      %v2001 = vpop.f32.mrb[0].mxu0
      %v2002 = vadd.f32 %v1905, %v2001
      %v2003 = vpop.f32.mrb[0].mxu0
      %v2004 = vpop.f32.mrb[0].mxu0
      %v2005 = vadd.f32 %v1908, %v2004
      %v2006 = vpop.f32.mrb[0].mxu0
      %2007 = vmatprep.mubr.bf16.mxu0 %v874
      %2008 = vmatmul.mubr.bf16.gmra.mrb[0].mxu0 %v873
      %v2009 = vpop.f32.mrb[0].mxu0
      %v2010 = vadd.f32 %v1913, %v2009
      %v2011 = vpop.f32.mrb[0].mxu0
      %v2012 = vpop.f32.mrb[0].mxu0
      %v2013 = vadd.f32 %v1916, %v2012
      %v2014 = vpop.f32.mrb[0].mxu0
      %2015 = vmatprep.mubr.bf16.mxu0 %v887
      %2016 = vmatmul.mubr.bf16.gmra.mrb[0].mxu0 %v886
      %v2017 = vpop.f32.mrb[0].mxu0
      %v2018 = vadd.f32 %v1921, %v2017
      %v2019 = vpop.f32.mrb[0].mxu0
      %v2020 = vpop.f32.mrb[0].mxu0
      %v2021 = vadd.f32 %v1924, %v2020
      %v2022 = vpop.f32.mrb[0].mxu0
      %2023 = vmatprep.mubr.bf16.mxu0 %v900
      %2024 = vmatmul.mubr.bf16.gmra.mrb[0].mxu0 %v899
      %v2025 = vpop.f32.mrb[0].mxu0
      %v2026 = vadd.f32 %v1929, %v2025
      %v2027 = vpop.f32.mrb[0].mxu0
      %v2028 = vpop.f32.mrb[0].mxu0
      %v2029 = vadd.f32 %v1932, %v2028
      %v2030 = vpop.f32.mrb[0].mxu0
      %2031 = vmatprep.mubr.bf16.mxu0 %v913
      %2032 = vmatmul.mubr.bf16.gmra.mrb[0].mxu0 %v912
      %v2033 = vpop.f32.mrb[0].mxu0
      %v2034 = vadd.f32 %v1937, %v2033
      %v2035 = vpop.f32.mrb[0].mxu0
      %v2036 = vpop.f32.mrb[0].mxu0
      %v2037 = vadd.f32 %v1940, %v2036
      %v2038 = vpop.f32.mrb[0].mxu0
      %2039 = vmatprep.mubr.bf16.mxu0 %v926
      %2040 = vmatmul.mubr.bf16.gmra.mrb[0].mxu0 %v925
      %v2041 = vpop.f32.mrb[0].mxu0
      %v2042 = vadd.f32 %v1945, %v2041
      %v2043 = vpop.f32.mrb[0].mxu0
      %v2044 = vpop.f32.mrb[0].mxu0
      %v2045 = vadd.f32 %v1948, %v2044
      %v2046 = vpop.f32.mrb[0].mxu0
      %2047 = vdwg.mxu0
      %2048 = vmatprep.subr.bf16.mxu0 0
      %2049 = vmatpush1.bf16.msra.mxu0 %v1516
      %2050 = vmatprep.subr.bf16.mxu0 0
      %2051 = vmatpush1.bf16.msra.mxu0 %v1517
      %2052 = vmatprep.subr.bf16.mxu0 0
      %2053 = vmatpush1.bf16.msra.mxu0 %v1518
      %2054 = vmatprep.subr.bf16.mxu0 0
      %2055 = vmatpush1.bf16.msra.mxu0 %v1519
      %2056 = vmatprep.subr.bf16.mxu0 0
      %2057 = vmatpush1.bf16.msra.mxu0 %v1520
      %2058 = vmatprep.subr.bf16.mxu0 0
      %2059 = vmatpush1.bf16.msra.mxu0 %v1521
      %2060 = vmatprep.subr.bf16.mxu0 0
      %2061 = vmatpush1.bf16.msra.mxu0 %v1522
      %2062 = vmatprep.subr.bf16.mxu0 0
      %2063 = vmatpush1.bf16.msra.mxu0 %v1523
      %2064 = vmatprep.subr.bf16.mxu0 0
      %2065 = vmatpush1.bf16.msra.mxu0 %v1524
      %2066 = vmatprep.subr.bf16.mxu0 0
      %2067 = vmatpush1.bf16.msra.mxu0 %v1525
      %2068 = vmatprep.subr.bf16.mxu0 0
      %2069 = vmatpush1.bf16.msra.mxu0 %v1526
      %2070 = vmatprep.subr.bf16.mxu0 0
      %2071 = vmatpush1.bf16.msra.mxu0 %v1527
      %2072 = vmatprep.subr.bf16.mxu0 0
      %2073 = vmatpush1.bf16.msra.mxu0 %v1528
      %2074 = vmatprep.subr.bf16.mxu0 0
      %2075 = vmatpush1.bf16.msra.mxu0 %v1529
      %2076 = vmatprep.subr.bf16.mxu0 0
      %2077 = vmatpush1.bf16.msra.mxu0 %v1530
      %2078 = vmatprep.subr.bf16.mxu0 0
      %2079 = vmatpush1.bf16.msra.mxu0 %v1531
      %2080 = vmatprep.mubr.bf16.mxu0 %v837
      %2081 = vmatmul.mubr.bf16.gmra.mrb[0].mxu0 %v836
      %v2082 = vpop.f32.mrb[0].mxu0
      %v2083 = vadd.f32 %v1986, %v2082
      %v2084 = vpop.f32.mrb[0].mxu0
      %v2085 = vpop.f32.mrb[0].mxu0
      %v2086 = vadd.f32 %v1989, %v2085
      %v2087 = vpop.f32.mrb[0].mxu0
      %2088 = vmatprep.mubr.bf16.mxu0 %v850
      %2089 = vmatmul.mubr.bf16.gmra.mrb[0].mxu0 %v849
      %v2090 = vpop.f32.mrb[0].mxu0
      %v2091 = vadd.f32 %v1994, %v2090
      %v2092 = vpop.f32.mrb[0].mxu0
      %v2093 = vpop.f32.mrb[0].mxu0
      %v2094 = vadd.f32 %v1997, %v2093
      %v2095 = vpop.f32.mrb[0].mxu0
      %2096 = vmatprep.mubr.bf16.mxu0 %v863
      %2097 = vmatmul.mubr.bf16.gmra.mrb[0].mxu0 %v862
      %v2098 = vpop.f32.mrb[0].mxu0
      %v2099 = vadd.f32 %v2002, %v2098
      %v2100 = vpop.f32.mrb[0].mxu0
      %v2101 = vpop.f32.mrb[0].mxu0
      %v2102 = vadd.f32 %v2005, %v2101
      %v2103 = vpop.f32.mrb[0].mxu0
      %2104 = vmatprep.mubr.bf16.mxu0 %v876
      %2105 = vmatmul.mubr.bf16.gmra.mrb[0].mxu0 %v875
      %v2106 = vpop.f32.mrb[0].mxu0
      %v2107 = vadd.f32 %v2010, %v2106
      %v2108 = vpop.f32.mrb[0].mxu0
      %v2109 = vpop.f32.mrb[0].mxu0
      %v2110 = vadd.f32 %v2013, %v2109
      %v2111 = vpop.f32.mrb[0].mxu0
      %2112 = vmatprep.mubr.bf16.mxu0 %v889
      %2113 = vmatmul.mubr.bf16.gmra.mrb[0].mxu0 %v888
      %v2114 = vpop.f32.mrb[0].mxu0
      %v2115 = vadd.f32 %v2018, %v2114
      %v2116 = vpop.f32.mrb[0].mxu0
      %v2117 = vpop.f32.mrb[0].mxu0
      %v2118 = vadd.f32 %v2021, %v2117
      %v2119 = vpop.f32.mrb[0].mxu0
      %2120 = vmatprep.mubr.bf16.mxu0 %v902
      %2121 = vmatmul.mubr.bf16.gmra.mrb[0].mxu0 %v901
      %v2122 = vpop.f32.mrb[0].mxu0
      %v2123 = vadd.f32 %v2026, %v2122
      %v2124 = vpop.f32.mrb[0].mxu0
      %v2125 = vpop.f32.mrb[0].mxu0
      %v2126 = vadd.f32 %v2029, %v2125
      %v2127 = vpop.f32.mrb[0].mxu0
      %2128 = vmatprep.mubr.bf16.mxu0 %v915
      %2129 = vmatmul.mubr.bf16.gmra.mrb[0].mxu0 %v914
      %v2130 = vpop.f32.mrb[0].mxu0
      %v2131 = vadd.f32 %v2034, %v2130
      %v2132 = vpop.f32.mrb[0].mxu0
      %v2133 = vpop.f32.mrb[0].mxu0
      %v2134 = vadd.f32 %v2037, %v2133
      %v2135 = vpop.f32.mrb[0].mxu0
      %2136 = vmatprep.mubr.bf16.mxu0 %v928
      %2137 = vmatmul.mubr.bf16.gmra.mrb[0].mxu0 %v927
      %v2138 = vpop.f32.mrb[0].mxu0
      %v2139 = vadd.f32 %v2042, %v2138
      %v2140 = vpop.f32.mrb[0].mxu0
      %v2141 = vpop.f32.mrb[0].mxu0
      %v2142 = vadd.f32 %v2045, %v2141
      %v2143 = vpop.f32.mrb[0].mxu0
      %2144 = vdwg.mxu0
      %2145 = vmatprep.subr.bf16.mxu0 0
      %2146 = vmatpush1.bf16.msra.mxu0 %v1532
      %2147 = vmatprep.subr.bf16.mxu0 0
      %2148 = vmatpush1.bf16.msra.mxu0 %v1533
      %2149 = vmatprep.subr.bf16.mxu0 0
      %2150 = vmatpush1.bf16.msra.mxu0 %v1534
      %2151 = vmatprep.subr.bf16.mxu0 0
      %2152 = vmatpush1.bf16.msra.mxu0 %v1535
      %2153 = vmatprep.subr.bf16.mxu0 0
      %2154 = vmatpush1.bf16.msra.mxu0 %v1536
      %2155 = vmatprep.subr.bf16.mxu0 0
      %2156 = vmatpush1.bf16.msra.mxu0 %v1537
      %2157 = vmatprep.subr.bf16.mxu0 0
      %2158 = vmatpush1.bf16.msra.mxu0 %v1538
      %2159 = vmatprep.subr.bf16.mxu0 0
      %2160 = vmatpush1.bf16.msra.mxu0 %v1539
      %2161 = vmatprep.subr.bf16.mxu0 0
      %2162 = vmatpush1.bf16.msra.mxu0 %v1540
      %2163 = vmatprep.subr.bf16.mxu0 0
      %2164 = vmatpush1.bf16.msra.mxu0 %v1541
      %2165 = vmatprep.subr.bf16.mxu0 0
      %2166 = vmatpush1.bf16.msra.mxu0 %v1542
      %2167 = vmatprep.subr.bf16.mxu0 0
      %2168 = vmatpush1.bf16.msra.mxu0 %v1543
      %2169 = vmatprep.subr.bf16.mxu0 0
      %2170 = vmatpush1.bf16.msra.mxu0 %v1544
      %2171 = vmatprep.subr.bf16.mxu0 0
      %2172 = vmatpush1.bf16.msra.mxu0 %v1545
      %2173 = vmatprep.subr.bf16.mxu0 0
      %2174 = vmatpush1.bf16.msra.mxu0 %v1546
      %2175 = vmatprep.subr.bf16.mxu0 0
      %2176 = vmatpush1.bf16.msra.mxu0 %v1547
      %2177 = vmatprep.mubr.bf16.mxu0 %v839
      %2178 = vmatmul.mubr.bf16.gmra.mrb[0].mxu0 %v838
      %v2179 = vpop.f32.mrb[0].mxu0
      %v2180 = vadd.f32 %v2083, %v2179
      %v2181 = vpop.f32.mrb[0].mxu0
      %v2182 = vpop.f32.mrb[0].mxu0
      %v2183 = vadd.f32 %v2086, %v2182
      %v2184 = vpop.f32.mrb[0].mxu0
      %2185 = vmatprep.mubr.bf16.mxu0 %v852
      %2186 = vmatmul.mubr.bf16.gmra.mrb[0].mxu0 %v851
      %v2187 = vpop.f32.mrb[0].mxu0
      %v2188 = vadd.f32 %v2091, %v2187
      %v2189 = vpop.f32.mrb[0].mxu0
      %v2190 = vpop.f32.mrb[0].mxu0
      %v2191 = vadd.f32 %v2094, %v2190
      %v2192 = vpop.f32.mrb[0].mxu0
      %2193 = vmatprep.mubr.bf16.mxu0 %v865
      %2194 = vmatmul.mubr.bf16.gmra.mrb[0].mxu0 %v864
      %v2195 = vpop.f32.mrb[0].mxu0
      %v2196 = vadd.f32 %v2099, %v2195
      %v2197 = vpop.f32.mrb[0].mxu0
      %v2198 = vpop.f32.mrb[0].mxu0
      %v2199 = vadd.f32 %v2102, %v2198
      %v2200 = vpop.f32.mrb[0].mxu0
      %2201 = vmatprep.mubr.bf16.mxu0 %v878
      %2202 = vmatmul.mubr.bf16.gmra.mrb[0].mxu0 %v877
      %v2203 = vpop.f32.mrb[0].mxu0
      %v2204 = vadd.f32 %v2107, %v2203
      %v2205 = vpop.f32.mrb[0].mxu0
      %v2206 = vpop.f32.mrb[0].mxu0
      %v2207 = vadd.f32 %v2110, %v2206
      %v2208 = vpop.f32.mrb[0].mxu0
      %2209 = vmatprep.mubr.bf16.mxu0 %v891
      %2210 = vmatmul.mubr.bf16.gmra.mrb[0].mxu0 %v890
      %v2211 = vpop.f32.mrb[0].mxu0
      %v2212 = vadd.f32 %v2115, %v2211
      %v2213 = vpop.f32.mrb[0].mxu0
      %v2214 = vpop.f32.mrb[0].mxu0
      %v2215 = vadd.f32 %v2118, %v2214
      %v2216 = vpop.f32.mrb[0].mxu0
      %2217 = vmatprep.mubr.bf16.mxu0 %v904
      %2218 = vmatmul.mubr.bf16.gmra.mrb[0].mxu0 %v903
      %v2219 = vpop.f32.mrb[0].mxu0
      %v2220 = vadd.f32 %v2123, %v2219
      %v2221 = vpop.f32.mrb[0].mxu0
      %v2222 = vpop.f32.mrb[0].mxu0
      %v2223 = vadd.f32 %v2126, %v2222
      %v2224 = vpop.f32.mrb[0].mxu0
      %2225 = vmatprep.mubr.bf16.mxu0 %v917
      %2226 = vmatmul.mubr.bf16.gmra.mrb[0].mxu0 %v916
      %v2227 = vpop.f32.mrb[0].mxu0
      %v2228 = vadd.f32 %v2131, %v2227
      %v2229 = vpop.f32.mrb[0].mxu0
      %v2230 = vpop.f32.mrb[0].mxu0
      %v2231 = vadd.f32 %v2134, %v2230
      %v2232 = vpop.f32.mrb[0].mxu0
      %2233 = vmatprep.mubr.bf16.mxu0 %v930
      %2234 = vmatmul.mubr.bf16.gmra.mrb[0].mxu0 %v929
      %v2235 = vpop.f32.mrb[0].mxu0
      %v2236 = vadd.f32 %v2139, %v2235
      %v2237 = vpop.f32.mrb[0].mxu0
      %v2238 = vpop.f32.mrb[0].mxu0
      %v2239 = vadd.f32 %v2142, %v2238
      %v2240 = vpop.f32.mrb[0].mxu0
      %2241 = vdwg.mxu0
      %2242 = vmatprep.subr.bf16.mxu0 0
      %2243 = vmatpush1.bf16.msra.mxu0 %v1548
      %2244 = vmatprep.subr.bf16.mxu0 0
      %2245 = vmatpush1.bf16.msra.mxu0 %v1549
      %2246 = vmatprep.subr.bf16.mxu0 0
      %2247 = vmatpush1.bf16.msra.mxu0 %v1550
      %2248 = vmatprep.subr.bf16.mxu0 0
      %2249 = vmatpush1.bf16.msra.mxu0 %v1551
      %2250 = vmatprep.subr.bf16.mxu0 0
      %2251 = vmatpush1.bf16.msra.mxu0 %v1552
      %2252 = vmatprep.subr.bf16.mxu0 0
      %2253 = vmatpush1.bf16.msra.mxu0 %v1553
      %2254 = vmatprep.subr.bf16.mxu0 0
      %2255 = vmatpush1.bf16.msra.mxu0 %v1554
      %2256 = vmatprep.subr.bf16.mxu0 0
      %2257 = vmatpush1.bf16.msra.mxu0 %v1555
      %2258 = vmatprep.subr.bf16.mxu0 0
      %2259 = vmatpush1.bf16.msra.mxu0 0
      %2260 = vmatprep.subr.bf16.mxu0 0
      %2261 = vmatpush1.bf16.msra.mxu0 0
      %2262 = vmatprep.subr.bf16.mxu0 0
      %2263 = vmatpush1.bf16.msra.mxu0 0
      %2264 = vmatprep.subr.bf16.mxu0 0
      %2265 = vmatpush1.bf16.msra.mxu0 0
      %2266 = vmatprep.subr.bf16.mxu0 0
      %2267 = vmatpush1.bf16.msra.mxu0 0
      %2268 = vmatprep.subr.bf16.mxu0 0
      %2269 = vmatpush1.bf16.msra.mxu0 0
      %2270 = vmatprep.subr.bf16.mxu0 0
      %2271 = vmatpush1.bf16.msra.mxu0 0
      %2272 = vmatprep.subr.bf16.mxu0 0
      %2273 = vmatpush1.bf16.msra.mxu0 0
      %2274 = vmatprep.mubr.bf16.mxu0 0
      %2275 = vmatmul.mubr.bf16.gmra.mrb[0].mxu0 %v840
      %v2276 = vpop.f32.mrb[0].mxu0
      %v2277 = vadd.f32 %v2180, %v2276
      %v2278 = vpop.f32.mrb[0].mxu0
      %v2279 = vpop.f32.mrb[0].mxu0
      %v2280 = vadd.f32 %v2183, %v2279
      %v2281 = vpop.f32.mrb[0].mxu0
      %2282 = vmatprep.mubr.bf16.mxu0 0
      %2283 = vmatmul.mubr.bf16.gmra.mrb[0].mxu0 %v853
      %v2284 = vpop.f32.mrb[0].mxu0
      %v2285 = vadd.f32 %v2188, %v2284
      %v2286 = vpop.f32.mrb[0].mxu0
      %v2287 = vpop.f32.mrb[0].mxu0
      %v2288 = vadd.f32 %v2191, %v2287
      %v2289 = vpop.f32.mrb[0].mxu0
      %2290 = vmatprep.mubr.bf16.mxu0 0
      %2291 = vmatmul.mubr.bf16.gmra.mrb[0].mxu0 %v866
      %v2292 = vpop.f32.mrb[0].mxu0
      %v2293 = vadd.f32 %v2196, %v2292
      %v2294 = vpop.f32.mrb[0].mxu0
      %v2295 = vpop.f32.mrb[0].mxu0
      %v2296 = vadd.f32 %v2199, %v2295
      %v2297 = vpop.f32.mrb[0].mxu0
      %2298 = vmatprep.mubr.bf16.mxu0 0
      %2299 = vmatmul.mubr.bf16.gmra.mrb[0].mxu0 %v879
      %v2300 = vpop.f32.mrb[0].mxu0
      %v2301 = vadd.f32 %v2204, %v2300
      %v2302 = vpop.f32.mrb[0].mxu0
      %v2303 = vpop.f32.mrb[0].mxu0
      %v2304 = vadd.f32 %v2207, %v2303
      %v2305 = vpop.f32.mrb[0].mxu0
      %2306 = vmatprep.mubr.bf16.mxu0 0
      %2307 = vmatmul.mubr.bf16.gmra.mrb[0].mxu0 %v892
      %v2308 = vpop.f32.mrb[0].mxu0
      %v2309 = vadd.f32 %v2212, %v2308
      %v2310 = vpop.f32.mrb[0].mxu0
      %v2311 = vpop.f32.mrb[0].mxu0
      %v2312 = vadd.f32 %v2215, %v2311
      %v2313 = vpop.f32.mrb[0].mxu0
      %2314 = vmatprep.mubr.bf16.mxu0 0
      %2315 = vmatmul.mubr.bf16.gmra.mrb[0].mxu0 %v905
      %v2316 = vpop.f32.mrb[0].mxu0
      %v2317 = vadd.f32 %v2220, %v2316
      %v2318 = vpop.f32.mrb[0].mxu0
      %v2319 = vpop.f32.mrb[0].mxu0
      %v2320 = vadd.f32 %v2223, %v2319
      %v2321 = vpop.f32.mrb[0].mxu0
      %2322 = vmatprep.mubr.bf16.mxu0 0
      %2323 = vmatmul.mubr.bf16.gmra.mrb[0].mxu0 %v918
      %v2324 = vpop.f32.mrb[0].mxu0
      %v2325 = vadd.f32 %v2228, %v2324
      %v2326 = vpop.f32.mrb[0].mxu0
      %v2327 = vpop.f32.mrb[0].mxu0
      %v2328 = vadd.f32 %v2231, %v2327
      %v2329 = vpop.f32.mrb[0].mxu0
      %2330 = vmatprep.mubr.bf16.mxu0 0
      %2331 = vmatmul.mubr.bf16.gmra.mrb[0].mxu0 %v931
      %v2332 = vpop.f32.mrb[0].mxu0
      %v2333 = vadd.f32 %v2236, %v2332
      %v2334 = vpop.f32.mrb[0].mxu0
      %v2335 = vpop.f32.mrb[0].mxu0
      %v2336 = vadd.f32 %v2239, %v2335
      %v2337 = vpop.f32.mrb[0].mxu0
      %2338 = vdwg.mxu0
      %v2339 = vmax.f32 %v2277, 0.0
      %v2340 = vmax.f32 %v2280, 0.0
      %v2341 = vmax.f32 %v2285, 0.0
      %v2342 = vmax.f32 %v2288, 0.0
      %v2343 = vmax.f32 %v2293, 0.0
      %v2344 = vmax.f32 %v2296, 0.0
      %v2345 = vmax.f32 %v2301, 0.0
      %v2346 = vmax.f32 %v2304, 0.0
      %v2347 = vmax.f32 %v2309, 0.0
      %v2348 = vmax.f32 %v2312, 0.0
      %v2349 = vmax.f32 %v2317, 0.0
      %v2350 = vmax.f32 %v2320, 0.0
      %v2351 = vmax.f32 %v2325, 0.0
      %v2352 = vmax.f32 %v2328, 0.0
      %v2353 = vmax.f32 %v2333, 0.0
      %v2354 = vmax.f32 %v2336, 0.0
      %v2355 = vpack.c.bf16 %v2340, %v2339
      %v2356 = vpack.c.bf16 %v2342, %v2341
      %v2357 = vpack.c.bf16 %v2344, %v2343
      %v2358 = vpack.c.bf16 %v2346, %v2345
      %v2359 = vpack.c.bf16 %v2348, %v2347
      %v2360 = vpack.c.bf16 %v2350, %v2349
      %v2361 = vpack.c.bf16 %v2352, %v2351
      %v2362 = vpack.c.bf16 %v2354, %v2353
      %v2363 = vlaneseq
      %v2364 = vshrl.u32 %v2363, 7
      %v2365 = vsub.s32 1, %v2364
      %v2366 = vrot.slane %v503, %v2365
      %v2369 = vunpack.c.l.b16 %v498
      %v2370 = vunpack.c.l.b16 %v499
      %v2371 = vpack.c.b16 %v2370, %v2369
      %vm2373 = vcmask 130048
      %v2375 = vsel %vm2373, %v2355, 0
      %v2378 = vsel %vm2373, %v2356, 0
      %v2381 = vsel %vm2373, %v2357, 0
      %v2384 = vsel %vm2373, %v2358, 0
      %v2387 = vsel %vm2373, %v2359, 0
      %v2390 = vsel %vm2373, %v2360, 0
      %v2393 = vsel %vm2373, %v2361, 0
      %v2396 = vsel %vm2373, %v2362, 0
      %2398 = vmatprep.subr.bf16.mxu0 0
      %2399 = vmatpush1.bf16.msra.mxu0 %v2371
      %2400 = vmatprep.subr.bf16.mxu0 0
      %2401 = vmatpush1.bf16.msra.mxu0 0
      %2402 = vmatprep.subr.bf16.mxu0 0
      %2403 = vmatpush1.bf16.msra.mxu0 0
      %2404 = vmatprep.subr.bf16.mxu0 0
      %2405 = vmatpush1.bf16.msra.mxu0 0
      %2406 = vmatprep.subr.bf16.mxu0 0
      %2407 = vmatpush1.bf16.msra.mxu0 0
      %2408 = vmatprep.subr.bf16.mxu0 0
      %2409 = vmatpush1.bf16.msra.mxu0 0
      %2410 = vmatprep.subr.bf16.mxu0 0
      %2411 = vmatpush1.bf16.msra.mxu0 0
      %2412 = vmatprep.subr.bf16.mxu0 0
      %2413 = vmatpush1.bf16.msra.mxu0 0
      %2414 = vmatprep.subr.bf16.mxu0 0
      %2415 = vmatpush1.bf16.msra.mxu0 0
      %2416 = vmatprep.subr.bf16.mxu0 0
      %2417 = vmatpush1.bf16.msra.mxu0 0
      %2418 = vmatprep.subr.bf16.mxu0 0
      %2419 = vmatpush1.bf16.msra.mxu0 0
      %2420 = vmatprep.subr.bf16.mxu0 0
      %2421 = vmatpush1.bf16.msra.mxu0 0
      %2422 = vmatprep.subr.bf16.mxu0 0
      %2423 = vmatpush1.bf16.msra.mxu0 0
      %2424 = vmatprep.subr.bf16.mxu0 0
      %2425 = vmatpush1.bf16.msra.mxu0 0
      %2426 = vmatprep.subr.bf16.mxu0 0
      %2427 = vmatpush1.bf16.msra.mxu0 0
      %2428 = vmatprep.subr.bf16.mxu0 0
      %2429 = vmatpush1.bf16.msra.mxu0 0
      %2430 = vmatprep.mubr.bf16.mxu0 0
      %2431 = vmatmul.mubr.bf16.gmra.mrb[0].mxu0 %v2375
      %v2432 = vpop.f32.mrb[0].mxu0
      %v2433 = vadd.f32 %v2366, %v2432
      %v2434 = vpop.f32.mrb[0].mxu0
      %v2435 = vpop.f32.mrb[0].mxu0
      %v2436 = vadd.f32 %v2366, %v2435
      %v2437 = vpop.f32.mrb[0].mxu0
      %2438 = vmatprep.mubr.bf16.mxu0 0
      %2439 = vmatmul.mubr.bf16.gmra.mrb[0].mxu0 %v2378
      %v2440 = vpop.f32.mrb[0].mxu0
      %v2441 = vadd.f32 %v2366, %v2440
      %v2442 = vpop.f32.mrb[0].mxu0
      %v2443 = vpop.f32.mrb[0].mxu0
      %v2444 = vadd.f32 %v2366, %v2443
      %v2445 = vpop.f32.mrb[0].mxu0
      %2446 = vmatprep.mubr.bf16.mxu0 0
      %2447 = vmatmul.mubr.bf16.gmra.mrb[0].mxu0 %v2381
      %v2448 = vpop.f32.mrb[0].mxu0
      %v2449 = vadd.f32 %v2366, %v2448
      %v2450 = vpop.f32.mrb[0].mxu0
      %v2451 = vpop.f32.mrb[0].mxu0
      %v2452 = vadd.f32 %v2366, %v2451
      %v2453 = vpop.f32.mrb[0].mxu0
      %2454 = vmatprep.mubr.bf16.mxu0 0
      %2455 = vmatmul.mubr.bf16.gmra.mrb[0].mxu0 %v2384
      %v2456 = vpop.f32.mrb[0].mxu0
      %v2457 = vadd.f32 %v2366, %v2456
      %v2458 = vpop.f32.mrb[0].mxu0
      %v2459 = vpop.f32.mrb[0].mxu0
      %v2460 = vadd.f32 %v2366, %v2459
      %v2461 = vpop.f32.mrb[0].mxu0
      %2462 = vmatprep.mubr.bf16.mxu0 0
      %2463 = vmatmul.mubr.bf16.gmra.mrb[0].mxu0 %v2387
      %v2464 = vpop.f32.mrb[0].mxu0
      %v2465 = vadd.f32 %v2366, %v2464
      %v2466 = vpop.f32.mrb[0].mxu0
      %v2467 = vpop.f32.mrb[0].mxu0
      %v2468 = vadd.f32 %v2366, %v2467
      %v2469 = vpop.f32.mrb[0].mxu0
      %2470 = vmatprep.mubr.bf16.mxu0 0
      %2471 = vmatmul.mubr.bf16.gmra.mrb[0].mxu0 %v2390
      %v2472 = vpop.f32.mrb[0].mxu0
      %v2473 = vadd.f32 %v2366, %v2472
      %v2474 = vpop.f32.mrb[0].mxu0
      %v2475 = vpop.f32.mrb[0].mxu0
      %v2476 = vadd.f32 %v2366, %v2475
      %v2477 = vpop.f32.mrb[0].mxu0
      %2478 = vmatprep.mubr.bf16.mxu0 0
      %2479 = vmatmul.mubr.bf16.gmra.mrb[0].mxu0 %v2393
      %v2480 = vpop.f32.mrb[0].mxu0
      %v2481 = vadd.f32 %v2366, %v2480
      %v2482 = vpop.f32.mrb[0].mxu0
      %v2483 = vpop.f32.mrb[0].mxu0
      %v2484 = vadd.f32 %v2366, %v2483
      %v2485 = vpop.f32.mrb[0].mxu0
      %2486 = vmatprep.mubr.bf16.mxu0 0
      %2487 = vmatmul.mubr.bf16.gmra.mrb[0].mxu0 %v2396
      %v2488 = vpop.f32.mrb[0].mxu0
      %v2489 = vadd.f32 %v2366, %v2488
      %v2490 = vpop.f32.mrb[0].mxu0
      %v2491 = vpop.f32.mrb[0].mxu0
      %v2492 = vadd.f32 %v2366, %v2491
      %v2493 = vpop.f32.mrb[0].mxu0
      %2494 = vdwg.mxu0
      %v2495 = vmax.f32 %v2433, 0.0
      %v2496 = vmax.f32 %v2436, 0.0
      %v2497 = vmax.f32 %v2441, 0.0
      %v2498 = vmax.f32 %v2444, 0.0
      %v2499 = vmax.f32 %v2449, 0.0
      %v2500 = vmax.f32 %v2452, 0.0
      %v2501 = vmax.f32 %v2457, 0.0
      %v2502 = vmax.f32 %v2460, 0.0
      %v2503 = vmax.f32 %v2465, 0.0
      %v2504 = vmax.f32 %v2468, 0.0
      %v2505 = vmax.f32 %v2473, 0.0
      %v2506 = vmax.f32 %v2476, 0.0
      %v2507 = vmax.f32 %v2481, 0.0
      %v2508 = vmax.f32 %v2484, 0.0
      %v2509 = vmax.f32 %v2489, 0.0
      %v2510 = vmax.f32 %v2492, 0.0
      %v2511 = vpack.c.bf16 %v2496, %v2495
      %v2512 = vpack.c.bf16 %v2498, %v2497
      %v2513 = vpack.c.bf16 %v2500, %v2499
      %v2514 = vpack.c.bf16 %v2502, %v2501
      %v2515 = vpack.c.bf16 %v2504, %v2503
      %v2516 = vpack.c.bf16 %v2506, %v2505
      %v2517 = vpack.c.bf16 %v2508, %v2507
      %v2518 = vpack.c.bf16 %v2510, %v2509
      %v2519 = vlaneseq
      %v2520 = vshrl.u32 %v2519, 7
      %v2521 = vsub.s32 2, %v2520
      %v2522 = vrot.slane %v503, %v2521
      %v2525 = vunpack.c.l.b16 %v500
      %v2526 = vunpack.c.l.b16 %v501
      %v2527 = vpack.c.b16 %v2526, %v2525
      %v2530 = vsel %vm2373, %v2511, 0
      %v2533 = vsel %vm2373, %v2512, 0
      %v2536 = vsel %vm2373, %v2513, 0
      %v2539 = vsel %vm2373, %v2514, 0
      %v2542 = vsel %vm2373, %v2515, 0
      %v2545 = vsel %vm2373, %v2516, 0
      %v2548 = vsel %vm2373, %v2517, 0
      %v2551 = vsel %vm2373, %v2518, 0
      %2553 = vmatprep.subr.bf16.mxu0 0
      %2554 = vmatpush1.bf16.msra.mxu0 %v2527
      %2555 = vmatprep.subr.bf16.mxu0 0
      %2556 = vmatpush1.bf16.msra.mxu0 0
      %2557 = vmatprep.subr.bf16.mxu0 0
      %2558 = vmatpush1.bf16.msra.mxu0 0
      %2559 = vmatprep.subr.bf16.mxu0 0
      %2560 = vmatpush1.bf16.msra.mxu0 0
      %2561 = vmatprep.subr.bf16.mxu0 0
      %2562 = vmatpush1.bf16.msra.mxu0 0
      %2563 = vmatprep.subr.bf16.mxu0 0
      %2564 = vmatpush1.bf16.msra.mxu0 0
      %2565 = vmatprep.subr.bf16.mxu0 0
      %2566 = vmatpush1.bf16.msra.mxu0 0
      %2567 = vmatprep.subr.bf16.mxu0 0
      %2568 = vmatpush1.bf16.msra.mxu0 0
      %2569 = vmatprep.subr.bf16.mxu0 0
      %2570 = vmatpush1.bf16.msra.mxu0 0
      %2571 = vmatprep.subr.bf16.mxu0 0
      %2572 = vmatpush1.bf16.msra.mxu0 0
      %2573 = vmatprep.subr.bf16.mxu0 0
      %2574 = vmatpush1.bf16.msra.mxu0 0
      %2575 = vmatprep.subr.bf16.mxu0 0
      %2576 = vmatpush1.bf16.msra.mxu0 0
      %2577 = vmatprep.subr.bf16.mxu0 0
      %2578 = vmatpush1.bf16.msra.mxu0 0
      %2579 = vmatprep.subr.bf16.mxu0 0
      %2580 = vmatpush1.bf16.msra.mxu0 0
      %2581 = vmatprep.subr.bf16.mxu0 0
      %2582 = vmatpush1.bf16.msra.mxu0 0
      %2583 = vmatprep.subr.bf16.mxu0 0
      %2584 = vmatpush1.bf16.msra.mxu0 0
      %2585 = vmatprep.mubr.bf16.mxu0 0
      %2586 = vmatmul.mubr.bf16.gmra.mrb[0].mxu0 %v2530
      %v2587 = vpop.f32.mrb[0].mxu0
      %v2588 = vadd.f32 %v2522, %v2587
      %v2589 = vpop.f32.mrb[0].mxu0
      %v2590 = vpop.f32.mrb[0].mxu0
      %v2591 = vadd.f32 %v2522, %v2590
      %v2592 = vpop.f32.mrb[0].mxu0
      %2593 = vmatprep.mubr.bf16.mxu0 0
      %2594 = vmatmul.mubr.bf16.gmra.mrb[0].mxu0 %v2533
      %v2595 = vpop.f32.mrb[0].mxu0
      %v2596 = vadd.f32 %v2522, %v2595
      %v2597 = vpop.f32.mrb[0].mxu0
      %v2598 = vpop.f32.mrb[0].mxu0
      %v2599 = vadd.f32 %v2522, %v2598
      %v2600 = vpop.f32.mrb[0].mxu0
      %2601 = vmatprep.mubr.bf16.mxu0 0
      %2602 = vmatmul.mubr.bf16.gmra.mrb[0].mxu0 %v2536
      %v2603 = vpop.f32.mrb[0].mxu0
      %v2604 = vadd.f32 %v2522, %v2603
      %v2605 = vpop.f32.mrb[0].mxu0
      %v2606 = vpop.f32.mrb[0].mxu0
      %v2607 = vadd.f32 %v2522, %v2606
      %v2608 = vpop.f32.mrb[0].mxu0
      %2609 = vmatprep.mubr.bf16.mxu0 0
      %2610 = vmatmul.mubr.bf16.gmra.mrb[0].mxu0 %v2539
      %v2611 = vpop.f32.mrb[0].mxu0
      %v2612 = vadd.f32 %v2522, %v2611
      %v2613 = vpop.f32.mrb[0].mxu0
      %v2614 = vpop.f32.mrb[0].mxu0
      %v2615 = vadd.f32 %v2522, %v2614
      %v2616 = vpop.f32.mrb[0].mxu0
      %2617 = vmatprep.mubr.bf16.mxu0 0
      %2618 = vmatmul.mubr.bf16.gmra.mrb[0].mxu0 %v2542
      %v2619 = vpop.f32.mrb[0].mxu0
      %v2620 = vadd.f32 %v2522, %v2619
      %v2621 = vpop.f32.mrb[0].mxu0
      %v2622 = vpop.f32.mrb[0].mxu0
      %v2623 = vadd.f32 %v2522, %v2622
      %v2624 = vpop.f32.mrb[0].mxu0
      %2625 = vmatprep.mubr.bf16.mxu0 0
      %2626 = vmatmul.mubr.bf16.gmra.mrb[0].mxu0 %v2545
      %v2627 = vpop.f32.mrb[0].mxu0
      %v2628 = vadd.f32 %v2522, %v2627
      %v2629 = vpop.f32.mrb[0].mxu0
      %v2630 = vpop.f32.mrb[0].mxu0
      %v2631 = vadd.f32 %v2522, %v2630
      %v2632 = vpop.f32.mrb[0].mxu0
      %2633 = vmatprep.mubr.bf16.mxu0 0
      %2634 = vmatmul.mubr.bf16.gmra.mrb[0].mxu0 %v2548
      %v2635 = vpop.f32.mrb[0].mxu0
      %v2636 = vadd.f32 %v2522, %v2635
      %v2637 = vpop.f32.mrb[0].mxu0
      %v2638 = vpop.f32.mrb[0].mxu0
      %v2639 = vadd.f32 %v2522, %v2638
      %v2640 = vpop.f32.mrb[0].mxu0
      %2641 = vmatprep.mubr.bf16.mxu0 0
      %2642 = vmatmul.mubr.bf16.gmra.mrb[0].mxu0 %v2551
      %v2643 = vpop.f32.mrb[0].mxu0
      %v2644 = vadd.f32 %v2522, %v2643
      %v2645 = vpop.f32.mrb[0].mxu0
      %v2646 = vpop.f32.mrb[0].mxu0
      %v2647 = vadd.f32 %v2522, %v2646
      %v2648 = vpop.f32.mrb[0].mxu0
      %2649 = vdwg.mxu0
      %2650 = vst [vmem:[%s175] sm:$0xff] %v2588
      %2651 = vst [vmem:[%s175 + $0x8] sm:$0xff] %v2591
      %2652 = vst [vmem:[%s175 + $0x10] sm:$0xff] %v2596
      %2653 = vst [vmem:[%s175 + $0x18] sm:$0xff] %v2599
      %2654 = vst [vmem:[%s175 + $0x20] sm:$0xff] %v2604
      %2655 = vst [vmem:[%s175 + $0x28] sm:$0xff] %v2607
      %2656 = vst [vmem:[%s175 + $0x30] sm:$0xff] %v2612
      %2657 = vst [vmem:[%s175 + $0x38] sm:$0xff] %v2615
      %2658 = vst [vmem:[%s175 + $0x40] sm:$0xff] %v2620
      %2659 = vst [vmem:[%s175 + $0x48] sm:$0xff] %v2623
      %2660 = vst [vmem:[%s175 + $0x50] sm:$0xff] %v2628
      %2661 = vst [vmem:[%s175 + $0x58] sm:$0xff] %v2631
      %2662 = vst [vmem:[%s175 + $0x60] sm:$0xff] %v2636
      %2663 = vst [vmem:[%s175 + $0x68] sm:$0xff] %v2639
      %2664 = vst [vmem:[%s175 + $0x70] sm:$0xff] %v2644
      %2665 = vst [vmem:[%s175 + $0x78] sm:$0xff] %v2647
      %s2666 = smul.u32 16, %s14
      %p2667 = scmp.lt.s32.totalorder %s2666, 31
      %s2668 = scalar_select %p2667, %s2666, 31
      %s2669 = smul.addr %s2668, 8
      %s2670 = scalar_lea.vmem %s3, %s2669
      // Predicated region
      $region33: #{simple_model_forward.1} parent=31 // pred_check
        %p2671 = pneg %p100
      $region34: #{simple_model_forward.1} parent=31 // pred_check_branch
        %2673 = sbr.rel (%p2671) target = $region36
      $region35: #{simple_model_forward.1} parent=31 // pred_region
        %s2674 = smul.u32 16, %s14
      $region36: #{simple_model_forward.1} parent=31 // pred_fallthru
        _
    $region32: #{simple_model_forward.1} parent=5 // pred_fallthru
      _
    %p2675 = scmp.le.s32.totalorder 2, %s9
    // Predicated region
    $region37: #{simple_model_forward.1} parent=5 // pred_check
      %p2676 = pneg %p2675
    $region38: #{simple_model_forward.1} parent=5 // pred_check_branch
      %2678 = sbr.rel (%p2676) target = $region40
    $region39: #{simple_model_forward.1} parent=5 // pred_region
      %s2679 = ssub.s32 %s9, 2
      // Predicated region
      $region41: #{simple_model_forward.1} parent=39 // pred_check
        %p2680 = pneg %p106
      $region42: #{simple_model_forward.1} parent=39 // pred_check_branch
        %2682 = sbr.rel (%p2680) target = $region44
      $region43: #{simple_model_forward.1} parent=39 // pred_region
        %s2683 = smul.u32 16, %s15
        %p2684 = scmp.lt.s32.totalorder %s2683, 31
        %s2685 = scalar_select %p2684, %s2683, 31
        %s2686 = smul.addr %s2685, 8
        %s2687 = scalar_lea.vmem %s3, %s2686
      $region44: #{simple_model_forward.1} parent=39 // pred_fallthru
        _
    $region40: #{simple_model_forward.1} parent=5 // pred_fallthru
      _
  $region6: #{simple_model_forward.1} parent=0 // loop_footer
    %s13 = sadd.s32 1, %s9
  $region7: #{simple_model_forward.1} parent=0 // loop_footer_branch
    %8 = sbr.rel target = $region3
  $region8: #{simple_model_forward.1} parent=0 // loop_exit
    _

</llo_original>
